<compile_context>
chip_gen: v5e
topology: v5e:2x2
jax: 0.10.0
libtpu: 0.0.40
codegen_flags: <defaults>
</compile_context>

<pallas_src>
import functools
import math

import jax
import jax.numpy as jnp
import numpy as np
from jax import lax
from jax.experimental import pallas as pl
from jax.experimental.pallas import tpu as pltpu


def _round_up(x, m):
    return ((x + m - 1) // m) * m


def _cdiv(a, b):
    return (a + b - 1) // b


# ----------------------------- shared attention math -------------------------


def _attend(q_ref, spec_ref, out_ref, g, wk_ref, wv_ref, bkv_ref, *,
            n_heads, head_dim):
    """Post-gather math: K/V projection + per-head masked softmax attention.

    g: [NB*L, Mp] bf16 gathered key/value source rows (this block).
    """
    NB, Mp = q_ref.shape
    L = spec_ref.shape[1]

    # Two MXU matmuls; bias-add and bf16 cast immediately so only one
    # [NB*L, Mp] f32 intermediate is live at a time.
    k3 = (jnp.dot(g, wk_ref[...], preferred_element_type=jnp.float32)
          + bkv_ref[0:1, :]).astype(jnp.bfloat16).reshape(NB, L, Mp)
    v3 = (jnp.dot(g, wv_ref[...], preferred_element_type=jnp.float32)
          + bkv_ref[1:2, :]).astype(jnp.bfloat16).reshape(NB, L, Mp)

    # Head-selection mask hm[h, m] = 1 iff lane m belongs to head h
    # (zero on padded lanes m >= M), generated in-kernel from iota.
    lane = lax.broadcasted_iota(jnp.int32, (n_heads, Mp), 1)
    head = lax.broadcasted_iota(jnp.int32, (n_heads, Mp), 0)
    hm = jnp.logical_and(lane >= head * head_dim, lane < (head + 1) * head_dim)
    hm_b = hm.astype(jnp.bfloat16)

    # Block-diagonal-query trick (q is already scaled: scale folded into Wk/bk),
    # qbd built directly in bf16 to halve its footprint.
    qbd = q_ref[...].astype(jnp.bfloat16)[:, None, :] * hm_b[None, :, :]   # [NB,H,Mp]
    s = jnp.einsum('nhm,nlm->nhl', qbd, k3,
                   preferred_element_type=jnp.float32)                     # [NB,H,L]

    # Masked softmax over the L selected keys.
    spec = spec_ref[...] > 0.0                                             # [NB,L]
    specb = spec[:, None, :]
    s = jnp.where(specb, s, jnp.float32(-1e30))
    m = jnp.max(s, axis=-1, keepdims=True)
    e = jnp.where(specb, jnp.exp(s - m), 0.0)
    denom = jnp.sum(e, axis=-1, keepdims=True)
    denom = jnp.where(denom > 0.0, denom, 1.0)   # all-unspecified query -> zero output
    attn = (e * pl.reciprocal(denom, approx=True)).astype(jnp.bfloat16)    # [NB,H,L]

    # attn @ V on the MXU, then select each lane's own head.
    ofull = jnp.einsum('nhl,nlm->nhm', attn, v3,
                       preferred_element_type=jnp.float32)                 # [NB,H,Mp]
    out = jnp.sum(ofull * hm.astype(jnp.float32)[None, :, :], axis=1)      # [NB,Mp]
    out_ref[...] = out.astype(out_ref.dtype)


# ----------------------- path A: table resident in VMEM ----------------------


def _subset_attn_vmem_kernel(rows_ref,            # SMEM [Np*L] int32 (scalar prefetch)
                             q_ref,               # VMEM [NB, Mp] f32
                             spec_ref,            # VMEM [NB, L]  f32 (>0 = specified)
                             vals_hbm,            # HBM  [nnz_p, Mp] f32
                             wk_hbm,              # HBM  [Mp, Mp] bf16 (scale folded in)
                             wv_hbm,              # HBM  [Mp, Mp] bf16
                             bkv_hbm,             # HBM  [2, Mp] f32
                             out_ref,             # VMEM [NB, Mp] f32
                             vals_vmem, wk_vmem, wv_vmem, bkv_vmem, gbuf, load_sem,
                             *, n_heads, head_dim, gather_unroll):
    g_id = pl.program_id(0)
    i = pl.program_id(1)
    inner = pl.num_programs(1)
    NB, Mp = q_ref.shape
    L = spec_ref.shape[1]
    rows_per_blk = NB * L

    # One-time bulk load (per outer/core chunk) of the whole sparse-values table
    # and the grid-invariant projection weights into SINGLE-buffered VMEM scratch.
    # Replaces NB*L tiny per-row HBM DMAs per grid step with plain VMEM loads.
    @pl.when(i == 0)
    def _():
        copies = (
            pltpu.make_async_copy(vals_hbm, vals_vmem, load_sem.at[0]),
            pltpu.make_async_copy(wk_hbm, wk_vmem, load_sem.at[1]),
            pltpu.make_async_copy(wv_hbm, wv_vmem, load_sem.at[2]),
            pltpu.make_async_copy(bkv_hbm, bkv_vmem, load_sem.at[3]),
        )
        for cp in copies:
            cp.start()
        for cp in copies:
            cp.wait()

    blk = g_id * inner + i
    base = blk * rows_per_blk

    # In-VMEM gather of this block's NB*L selected rows (manually unrolled so the
    # scalar index reads and vector row copies pipeline).
    steps = rows_per_blk // gather_unroll

    def gather_body(step, carry):
        j0 = step * gather_unroll
        for u in range(gather_unroll):
            j = j0 + u
            row = rows_ref[base + j]
            gbuf[pl.ds(j, 1), :] = vals_vmem[pl.ds(row, 1), :]
        return carry

    lax.fori_loop(0, steps, gather_body, 0)

    _attend(q_ref, spec_ref, out_ref, gbuf[...].astype(jnp.bfloat16),
            wk_vmem, wv_vmem, bkv_vmem, n_heads=n_heads, head_dim=head_dim)


# ------------------- path B: fallback HBM gather (big tables) ----------------


def _subset_attn_hbm_kernel(rows_ref,             # SMEM [Np*L] int32 (scalar prefetch)
                            q_ref,                # VMEM [NB, Mp] f32
                            spec_ref,             # VMEM [NB, L] f32
                            vals_hbm,             # HBM  [nnz_p, Mp] f32
                            wk_ref, wv_ref, bkv_ref,   # VMEM (constant index_map)
                            out_ref,              # VMEM [NB, Mp] f32
                            gbuf,                 # VMEM [2, NB*L, Mp] f32
                            sem,                  # DMA semaphores (2,)
                            *, n_heads, head_dim, issue_unroll):
    i = pl.program_id(0)
    nblk = pl.num_programs(0)
    NB, Mp = q_ref.shape
    L = spec_ref.shape[1]
    rows_per_blk = NB * L

    # Double-buffered per-row HBM gather: block i+1 is issued while block i computes.
    def issue_gather(blk, slot):
        steps = rows_per_blk // issue_unroll

        def body(step, carry):
            j0 = step * issue_unroll
            for u in range(issue_unroll):
                j = j0 + u
                row = rows_ref[blk * rows_per_blk + j]
                pltpu.make_async_copy(vals_hbm.at[row], gbuf.at[slot, j],
                                      sem.at[slot]).start()
            return carry

        lax.fori_loop(0, steps, body, 0)

    @pl.when(i == 0)
    def _():
        issue_gather(0, 0)

    @pl.when(i + 1 < nblk)
    def _():
        issue_gather(i + 1, (i + 1) % 2)

    slot = i % 2
    # All row copies for this slot signal the same DMA semaphore (which counts
    # bytes): one aggregate wait sized to the full slab replaces NB*L per-row
    # waits / descriptor constructions.
    pltpu.make_async_copy(gbuf.at[slot], gbuf.at[slot], sem.at[slot]).wait()

    _attend(q_ref, spec_ref, out_ref, gbuf[slot].astype(jnp.bfloat16),
            wk_ref, wv_ref, bkv_ref, n_heads=n_heads, head_dim=head_dim)


# --------------------------------- wrapper ------------------------------------


def subset_attention_pallas(sparse_values, safe_row, query, is_specified,
                            query_mask, key_weight, value_weight,
                            key_bias, value_bias, n_heads,
                            scale_factor=None, block_q=128,
                            force_hbm_gather=False,
                            vmem_budget_bytes=40 * 1024 * 1024):
    """Subset-attention hot path (gather + KV projection + masked MHA) on TPU."""
    N, L = safe_row.shape
    nnz, M = sparse_values.shape
    assert M % n_heads == 0
    D = M // n_heads
    scale = float(scale_factor) if scale_factor is not None else 1.0 / math.sqrt(D)

    Mp = _round_up(M, 128)                      # lane-dense feature dim
    nnz_p = _round_up(nnz, 8)

    # Whole-table VMEM residency whenever it fits the budget (kills per-row HBM
    # gather DMAs); fall back to double-buffered row DMAs otherwise.
    table_bytes = nnz_p * Mp * 4
    table_in_vmem = (not force_hbm_gather) and (table_bytes <= vmem_budget_bytes // 2)

    def est_vmem(nb):
        weights = 2 * Mp * Mp * 2 + 8 * Mp * 4                      # Wk/Wv bf16 + biases
        table = table_bytes if table_in_vmem else 0
        gather = (1 if table_in_vmem else 2) * nb * L * Mp * 4      # gather buffer(s)
        io = 2 * 2 * nb * Mp * 4 + 2 * nb * max(L, 8) * 4           # q/out/spec blocks
        interm = nb * L * Mp * 4 + 2 * nb * L * Mp * 2 + 2 * nb * n_heads * Mp * 4
        return weights + table + gather + io + interm

    # Budget-driven query block (v7x has only 64 MiB VMEM per core; v5e's default
    # scoped limit is 16 MiB) -- shrink NB until the estimate fits the budget.
    NB = min(_round_up(block_q, 8), _round_up(N, 8))
    while NB > 8 and est_vmem(NB) > vmem_budget_bytes:
        NB = max(8, _round_up(NB // 2, 8))
    vmem_limit = 48 * 1024 * 1024

    # Fold query_mask into the key-specified mask: fully-masked queries get a
    # zero softmax denominator and therefore a zero output inside the kernel.
    spec = jnp.logical_and(is_specified, jnp.logical_not(query_mask)[:, None])
    spec_f = spec.astype(jnp.float32)
    rows = safe_row.astype(jnp.int32)
    q = query.astype(jnp.float32)
    if Mp != M:
        q = jnp.pad(q, ((0, 0), (0, Mp - M)))

    n_blocks = _cdiv(N, NB)
    # Outer "parallel" axis (2 chunks) lets v7x's two TensorCores split the query
    # blocks; each chunk re-primes its invariant VMEM tables at inner==0.
    G = 2 if (table_in_vmem and n_blocks >= 2) else 1
    n_blocks = _round_up(n_blocks, G)
    Np = n_blocks * NB
    if Np != N:
        pad_n = Np - N
        q = jnp.pad(q, ((0, pad_n), (0, 0)))
        spec_f = jnp.pad(spec_f, ((0, pad_n), (0, 0)))
        rows = jnp.pad(rows, ((0, pad_n), (0, 0)))
    rows_flat = rows.reshape(Np * L)

    values_f = sparse_values.astype(jnp.float32)
    values_f = jnp.pad(values_f, ((0, nnz_p - nnz), (0, Mp - M)))

    zero_b = jnp.zeros((M,), jnp.float32)
    kb = key_bias if key_bias is not None else zero_b
    vb = value_bias if value_bias is not None else zero_b

    # Pre-transposed projection weights with the attention scale folded into the
    # key projection (linearity) -- the kernel never multiplies q by scale.
    def pad_mm(w):
        return jnp.pad(w.astype(jnp.float32), ((0, Mp - M), (0, Mp - M)))

    wk = (pad_mm(key_weight.T) * jnp.float32(scale)).astype(jnp.bfloat16)   # [Mp, Mp]
    wv = pad_mm(value_weight.T).astype(jnp.bfloat16)                        # [Mp, Mp]
    bkv = jnp.stack([
        jnp.pad(kb.astype(jnp.float32) * jnp.float32(scale), (0, Mp - M)),
        jnp.pad(vb.astype(jnp.float32), (0, Mp - M)),
    ])                                                                      # [2, Mp]

    rows_per_blk = NB * L
    unroll = 8 if rows_per_blk % 8 == 0 else (
        4 if rows_per_blk % 4 == 0 else (2 if rows_per_blk % 2 == 0 else 1))

    if table_in_vmem:
        inner = n_blocks // G
        kernel = functools.partial(_subset_attn_vmem_kernel, n_heads=n_heads,
                                   head_dim=D, gather_unroll=unroll)
        out = pl.pallas_call(
            kernel,
            out_shape=jax.ShapeDtypeStruct((Np, Mp), jnp.float32),
            grid_spec=pltpu.PrefetchScalarGridSpec(
                num_scalar_prefetch=1,
                grid=(G, inner),
                in_specs=[
                    pl.BlockSpec((NB, Mp), lambda g, i, rf: (g * inner + i, 0)),
                    pl.BlockSpec((NB, L), lambda g, i, rf: (g * inner + i, 0)),
                    pl.BlockSpec(memory_space=pl.ANY),     # sparse values table (HBM)
                    pl.BlockSpec(memory_space=pl.ANY),     # Wk^T (loaded once)
                    pl.BlockSpec(memory_space=pl.ANY),     # Wv^T (loaded once)
                    pl.BlockSpec(memory_space=pl.ANY),     # [bk; bv]
                ],
                out_specs=pl.BlockSpec((NB, Mp), lambda g, i, rf: (g * inner + i, 0)),
                scratch_shapes=[
                    pltpu.VMEM((nnz_p, Mp), jnp.float32),    # resident table
                    pltpu.VMEM((Mp, Mp), jnp.bfloat16),      # Wk^T (single-buffered)
                    pltpu.VMEM((Mp, Mp), jnp.bfloat16),      # Wv^T (single-buffered)
                    pltpu.VMEM((2, Mp), jnp.float32),        # biases
                    pltpu.VMEM((NB * L, Mp), jnp.float32),   # gathered rows
                    pltpu.SemaphoreType.DMA((4,)),
                ],
            ),
            compiler_params=pltpu.CompilerParams(
                dimension_semantics=("parallel", "arbitrary"),
                vmem_limit_bytes=vmem_limit,
            ),
        )(rows_flat, q, spec_f, values_f, wk, wv, bkv)
    else:
        kernel = functools.partial(_subset_attn_hbm_kernel, n_heads=n_heads,
                                   head_dim=D, issue_unroll=unroll)
        out = pl.pallas_call(
            kernel,
            out_shape=jax.ShapeDtypeStruct((Np, Mp), jnp.float32),
            grid_spec=pltpu.PrefetchScalarGridSpec(
                num_scalar_prefetch=1,
                grid=(n_blocks,),
                in_specs=[
                    pl.BlockSpec((NB, Mp), lambda i, rf: (i, 0)),
                    pl.BlockSpec((NB, L), lambda i, rf: (i, 0)),
                    pl.BlockSpec(memory_space=pl.ANY),             # sparse values (HBM)
                    pl.BlockSpec((Mp, Mp), lambda i, rf: (0, 0)),  # Wk^T (constant)
                    pl.BlockSpec((Mp, Mp), lambda i, rf: (0, 0)),  # Wv^T (constant)
                    pl.BlockSpec((2, Mp), lambda i, rf: (0, 0)),   # biases
                ],
                out_specs=pl.BlockSpec((NB, Mp), lambda i, rf: (i, 0)),
                scratch_shapes=[
                    pltpu.VMEM((2, NB * L, Mp), jnp.float32),      # gather double-buffer
                    pltpu.SemaphoreType.DMA((2,)),
                ],
            ),
            compiler_params=pltpu.CompilerParams(
                # Sequential: the gather for block i+1 is issued at step i.
                dimension_semantics=("arbitrary",),
                vmem_limit_bytes=vmem_limit,
            ),
        )(rows_flat, q, spec_f, values_f, wk, wv, bkv)

    return out[:N, :M]


# --------------------------- JAX glue (sparse mapping) -----------------------


def get_sparse_index_mapping(nnz_linear_idx, nnz, spatial_shape, index_tensor):
    """Maps [N, L, S] spatial indices to rows of the coalesced values tensor.

    Returns (safe_row [N, L] int32, is_specified [N, L] bool). Out-of-range /
    negative indices and indices not present among the nnz are unspecified.
    """
    S = len(spatial_shape)
    in_bounds = jnp.ones(index_tensor.shape[:-1], dtype=bool)
    linear = jnp.zeros(index_tensor.shape[:-1], dtype=jnp.int32)
    for d in range(S):
        idx_d = index_tensor[..., d]
        in_bounds &= (idx_d >= 0) & (idx_d < spatial_shape[d])
        linear = linear * spatial_shape[d] + jnp.clip(idx_d, 0, spatial_shape[d] - 1)
    total = int(np.prod(spatial_shape))
    lut = jnp.full((total,), -1, jnp.int32).at[nnz_linear_idx].set(
        jnp.arange(nnz, dtype=jnp.int32))
    row = lut[linear]
    is_specified = in_bounds & (row >= 0)
    safe_row = jnp.where(is_specified, row, 0)
    return safe_row, is_specified


def batch_sparse_index_subset_attn_pallas(
        sparse_values, nnz_linear_idx, spatial_shape,
        index_tensor, query_tensor, n_heads,
        key_weight, value_weight, key_bias, value_bias,
        query_mask=None, scale_factor=None, block_q=128, force_hbm_gather=False):
    """Forward pass of BatchSparseIndexSubsetAttention (RoPE / background embedding omitted)."""
    N, L, _ = index_tensor.shape
    nnz = sparse_values.shape[0]
    safe_row, is_specified = get_sparse_index_mapping(
        nnz_linear_idx, nnz, spatial_shape, index_tensor)
    if query_mask is None:
        query_mask = jnp.zeros((N,), dtype=bool)
    attended = subset_attention_pallas(
        sparse_values, safe_row, query_tensor, is_specified, query_mask,
        key_weight, value_weight, key_bias, value_bias,
        n_heads, scale_factor, block_q=block_q, force_hbm_gather=force_hbm_gather)
    return attended, is_specified


# ------------------------------- reference -----------------------------------


def reference_subset_attn(gathered, query, is_specified, query_mask,
                          key_weight, value_weight, key_bias, value_bias,
                          n_heads, scale_factor=None):
    N, L, M = gathered.shape
    D = M // n_heads
    scale = float(scale_factor) if scale_factor is not None else 1.0 / math.sqrt(D)

    g2 = gathered.reshape(N * L, M)
    k = (jnp.dot(g2, key_weight.T, preferred_element_type=jnp.float32)
         + key_bias[None, :]).reshape(N, L, n_heads, D)
    v = (jnp.dot(g2, value_weight.T, preferred_element_type=jnp.float32)
         + value_bias[None, :]).reshape(N, L, n_heads, D)
    qh = query.reshape(N, n_heads, D)

    s = jnp.einsum('nhd,nlhd->nhl', qh, k) * scale             # [N, H, L]
    spec = is_specified[:, None, :]                            # [N, 1, L]
    s = jnp.where(spec, s, -1e30)
    m = jnp.max(s, axis=-1, keepdims=True)
    e = jnp.where(spec, jnp.exp(s - m), 0.0)
    denom = jnp.sum(e, axis=-1, keepdims=True)
    attn = e / jnp.where(denom > 0.0, denom, 1.0)
    out = jnp.einsum('nhl,nlhd->nhd', attn, v).reshape(N, M)
    out = jnp.where(query_mask[:, None], 0.0, out)
    return out


# --------------------------------- main ---------------------------------------


if __name__ == "__main__":
    key = jax.random.PRNGKey(0)
    N, L, M, H = 16, 8, 32, 4          # queries, keys per query, embed dim, heads
    spatial_shape = (16, 16)           # S = 2 sparse dims
    total = spatial_shape[0] * spatial_shape[1]
    nnz = 100

    k0, k1, k2, k3, k4, k5 = jax.random.split(key, 6)

    # Deterministic parameter init mimicking nn.Linear(M, 2M, bias=True)
    bound = 1.0 / math.sqrt(M)
    kv_weight = jax.random.uniform(k0, (2 * M, M), jnp.float32, -bound, bound)
    kv_bias = jax.random.uniform(k1, (2 * M,), jnp.float32, -bound, bound)
    key_weight, value_weight = kv_weight[:M], kv_weight[M:]
    key_bias, value_bias = kv_bias[:M], kv_bias[M:]

    # Synthetic coalesced sparse tensor: nnz rows with M features each.
    nnz_linear_idx = jnp.sort(
        jax.random.permutation(k2, total)[:nnz].astype(jnp.int32))
    sparse_values = jax.random.normal(k3, (nnz, M), jnp.float32)

    # Index tensor with some out-of-range entries (-> unspecified), queries, query mask.
    index_tensor = jax.random.randint(k4, (N, L, 2), -2, 18, dtype=jnp.int32)
    query_tensor = jax.random.normal(k5, (N, M), jnp.float32)
    query_mask = jnp.zeros((N,), dtype=bool).at[3].set(True)

    # Pure-JAX f32 reference of the same math.
    safe_row, spec_mask = get_sparse_index_mapping(
        nnz_linear_idx, nnz, spatial_shape, index_tensor)
    gathered = sparse_values[safe_row]
    expected = reference_subset_attn(
        gathered, query_tensor, spec_mask, query_mask,
        key_weight, value_weight, key_bias, value_bias, H)

    # Path A (default): whole sparse-values table resident in VMEM.
    attended, is_specified = batch_sparse_index_subset_attn_pallas(
        sparse_values, nnz_linear_idx, spatial_shape,
        index_tensor, query_tensor, H,
        key_weight, value_weight, key_bias, value_bias,
        query_mask=query_mask, scale_factor=None, block_q=8)
    attended = jax.block_until_ready(attended)
    is_specified = jax.block_until_ready(is_specified)

    assert attended.shape == (N, M)
    assert is_specified.shape == (N, L)
    np.testing.assert_allclose(np.asarray(attended), np.asarray(expected),
                               rtol=2e-2, atol=2e-2)
    np.testing.assert_array_equal(np.asarray(is_specified), np.asarray(spec_mask))

    # Path B: fallback double-buffered per-row HBM gather (tables too big for VMEM).
    attended_b, _ = batch_sparse_index_subset_attn_pallas(
        sparse_values, nnz_linear_idx, spatial_shape,
        index_tensor, query_tensor, H,
        key_weight, value_weight, key_bias, value_bias,
        query_mask=query_mask, scale_factor=None, block_q=8, force_hbm_gather=True)
    attended_b = jax.block_until_ready(attended_b)
    np.testing.assert_allclose(np.asarray(attended_b), np.asarray(expected),
                               rtol=2e-2, atol=2e-2)

    print("KERNEL_OK")
</pallas_src>

<mosaic_0001>
module attributes {stable_mosaic.version = 11 : i64} {
  func.func @_subset_attn_vmem_kernel(%arg0: i32, %arg1: i32, %arg2: memref<128xi32, #tpu.memory_space<smem>>, %arg3: memref<8x128xf32, #tpu.memory_space<vmem>>, %arg4: memref<8x8xf32, #tpu.memory_space<vmem>>, %arg5: memref<104x128xf32, #tpu.memory_space<any>>, %arg6: memref<128x128xbf16, #tpu.memory_space<any>>, %arg7: memref<128x128xbf16, #tpu.memory_space<any>>, %arg8: memref<2x128xf32, #tpu.memory_space<any>>, %arg9: memref<8x128xf32, #tpu.memory_space<vmem>>, %arg10: memref<104x128xf32, #tpu.memory_space<vmem>>, %arg11: memref<128x128xbf16, #tpu.memory_space<vmem>>, %arg12: memref<128x128xbf16, #tpu.memory_space<vmem>>, %arg13: memref<2x128xf32, #tpu.memory_space<vmem>>, %arg14: memref<64x128xf32, #tpu.memory_space<vmem>>, %arg15: memref<4x!tpu.dma_semaphore, #tpu.memory_space<semaphore_mem>>) attributes {dimension_semantics = [#tpu.dimension_semantics<parallel>, #tpu.dimension_semantics<arbitrary>], iteration_bounds = array<i64: 2, 1>, scalar_prefetch = 1 : i64, scratch_operands = 6 : i64, tpu.core_type = #tpu.core_type<tc>, window_params = [{transform_indices = @transform_0, window_bounds = array<i64: 8, 128>}, {transform_indices = @transform_1, window_bounds = array<i64: 8, 8>}, {}, {}, {}, {}, {transform_indices = @transform_6, window_bounds = array<i64: 8, 128>}]} {
    %c0_i32 = arith.constant 0 : i32
    %0 = arith.cmpi eq, %arg1, %c0_i32 : i32
    %1 = arith.extui %0 : i1 to i32
    %c0_i32_0 = arith.constant 0 : i32
    %2 = arith.cmpi ne, %1, %c0_i32_0 : i32
    scf.if %2 {
      %c0_i32_32 = arith.constant 0 : i32
      %80 = tpu.memref_slice %arg15[%c0_i32_32] : memref<4x!tpu.dma_semaphore, #tpu.memory_space<semaphore_mem>> -> memref<1x!tpu.dma_semaphore, #tpu.memory_space<semaphore_mem>>
      %81 = tpu.memref_squeeze %80 : memref<1x!tpu.dma_semaphore, #tpu.memory_space<semaphore_mem>> -> memref<!tpu.dma_semaphore, #tpu.memory_space<semaphore_mem>>
      tpu.enqueue_dma source(%arg5 : memref<104x128xf32, #tpu.memory_space<any>>) target(%arg10 : memref<104x128xf32, #tpu.memory_space<vmem>>) target_semaphore(%81 : memref<!tpu.dma_semaphore, #tpu.memory_space<semaphore_mem>>)
      %c1_i32_33 = arith.constant 1 : i32
      %82 = tpu.memref_slice %arg15[%c1_i32_33] : memref<4x!tpu.dma_semaphore, #tpu.memory_space<semaphore_mem>> -> memref<1x!tpu.dma_semaphore, #tpu.memory_space<semaphore_mem>>
      %83 = tpu.memref_squeeze %82 : memref<1x!tpu.dma_semaphore, #tpu.memory_space<semaphore_mem>> -> memref<!tpu.dma_semaphore, #tpu.memory_space<semaphore_mem>>
      tpu.enqueue_dma source(%arg6 : memref<128x128xbf16, #tpu.memory_space<any>>) target(%arg11 : memref<128x128xbf16, #tpu.memory_space<vmem>>) target_semaphore(%83 : memref<!tpu.dma_semaphore, #tpu.memory_space<semaphore_mem>>)
      %c2_i32 = arith.constant 2 : i32
      %84 = tpu.memref_slice %arg15[%c2_i32] : memref<4x!tpu.dma_semaphore, #tpu.memory_space<semaphore_mem>> -> memref<1x!tpu.dma_semaphore, #tpu.memory_space<semaphore_mem>>
      %85 = tpu.memref_squeeze %84 : memref<1x!tpu.dma_semaphore, #tpu.memory_space<semaphore_mem>> -> memref<!tpu.dma_semaphore, #tpu.memory_space<semaphore_mem>>
      tpu.enqueue_dma source(%arg7 : memref<128x128xbf16, #tpu.memory_space<any>>) target(%arg12 : memref<128x128xbf16, #tpu.memory_space<vmem>>) target_semaphore(%85 : memref<!tpu.dma_semaphore, #tpu.memory_space<semaphore_mem>>)
      %c3_i32 = arith.constant 3 : i32
      %86 = tpu.memref_slice %arg15[%c3_i32] : memref<4x!tpu.dma_semaphore, #tpu.memory_space<semaphore_mem>> -> memref<1x!tpu.dma_semaphore, #tpu.memory_space<semaphore_mem>>
      %87 = tpu.memref_squeeze %86 : memref<1x!tpu.dma_semaphore, #tpu.memory_space<semaphore_mem>> -> memref<!tpu.dma_semaphore, #tpu.memory_space<semaphore_mem>>
      tpu.enqueue_dma source(%arg8 : memref<2x128xf32, #tpu.memory_space<any>>) target(%arg13 : memref<2x128xf32, #tpu.memory_space<vmem>>) target_semaphore(%87 : memref<!tpu.dma_semaphore, #tpu.memory_space<semaphore_mem>>)
      %c0_i32_34 = arith.constant 0 : i32
      %88 = tpu.memref_slice %arg15[%c0_i32_34] : memref<4x!tpu.dma_semaphore, #tpu.memory_space<semaphore_mem>> -> memref<1x!tpu.dma_semaphore, #tpu.memory_space<semaphore_mem>>
      %89 = tpu.memref_squeeze %88 : memref<1x!tpu.dma_semaphore, #tpu.memory_space<semaphore_mem>> -> memref<!tpu.dma_semaphore, #tpu.memory_space<semaphore_mem>>
      tpu.wait_dma2 semaphore(%89 : memref<!tpu.dma_semaphore, #tpu.memory_space<semaphore_mem>>) src(%arg5 : memref<104x128xf32, #tpu.memory_space<any>>) dst(%arg10 : memref<104x128xf32, #tpu.memory_space<vmem>>)
      %c1_i32_35 = arith.constant 1 : i32
      %90 = tpu.memref_slice %arg15[%c1_i32_35] : memref<4x!tpu.dma_semaphore, #tpu.memory_space<semaphore_mem>> -> memref<1x!tpu.dma_semaphore, #tpu.memory_space<semaphore_mem>>
      %91 = tpu.memref_squeeze %90 : memref<1x!tpu.dma_semaphore, #tpu.memory_space<semaphore_mem>> -> memref<!tpu.dma_semaphore, #tpu.memory_space<semaphore_mem>>
      tpu.wait_dma2 semaphore(%91 : memref<!tpu.dma_semaphore, #tpu.memory_space<semaphore_mem>>) src(%arg6 : memref<128x128xbf16, #tpu.memory_space<any>>) dst(%arg11 : memref<128x128xbf16, #tpu.memory_space<vmem>>)
      %c2_i32_36 = arith.constant 2 : i32
      %92 = tpu.memref_slice %arg15[%c2_i32_36] : memref<4x!tpu.dma_semaphore, #tpu.memory_space<semaphore_mem>> -> memref<1x!tpu.dma_semaphore, #tpu.memory_space<semaphore_mem>>
      %93 = tpu.memref_squeeze %92 : memref<1x!tpu.dma_semaphore, #tpu.memory_space<semaphore_mem>> -> memref<!tpu.dma_semaphore, #tpu.memory_space<semaphore_mem>>
      tpu.wait_dma2 semaphore(%93 : memref<!tpu.dma_semaphore, #tpu.memory_space<semaphore_mem>>) src(%arg7 : memref<128x128xbf16, #tpu.memory_space<any>>) dst(%arg12 : memref<128x128xbf16, #tpu.memory_space<vmem>>)
      %c3_i32_37 = arith.constant 3 : i32
      %94 = tpu.memref_slice %arg15[%c3_i32_37] : memref<4x!tpu.dma_semaphore, #tpu.memory_space<semaphore_mem>> -> memref<1x!tpu.dma_semaphore, #tpu.memory_space<semaphore_mem>>
      %95 = tpu.memref_squeeze %94 : memref<1x!tpu.dma_semaphore, #tpu.memory_space<semaphore_mem>> -> memref<!tpu.dma_semaphore, #tpu.memory_space<semaphore_mem>>
      tpu.wait_dma2 semaphore(%95 : memref<!tpu.dma_semaphore, #tpu.memory_space<semaphore_mem>>) src(%arg8 : memref<2x128xf32, #tpu.memory_space<any>>) dst(%arg13 : memref<2x128xf32, #tpu.memory_space<vmem>>)
    } else {
    }
    %c1_i32 = arith.constant 1 : i32
    %3 = arith.muli %arg0, %c1_i32 : i32
    %4 = arith.addi %3, %arg1 : i32
    %c64_i32 = arith.constant 64 : i32
    %5 = arith.muli %4, %c64_i32 : i32
    %c0_i32_1 = arith.constant 0 : i32
    %c8_i32 = arith.constant 8 : i32
    %6 = arith.addi %c0_i32_1, %c8_i32 : i32
    %c1_i32_2 = arith.constant 1 : i32
    scf.for %arg16 = %c0_i32_1 to %6 step %c1_i32_2  : i32 {
      %c8_i32_32 = arith.constant 8 : i32
      %80 = arith.muli %arg16, %c8_i32_32 : i32
      %c0_i32_33 = arith.constant 0 : i32
      %81 = arith.addi %80, %c0_i32_33 : i32
      %82 = arith.addi %5, %81 : i32
      %83 = arith.index_cast %82 : i32 to index
      %84 = memref.load %arg2[%83] : memref<128xi32, #tpu.memory_space<smem>>
      %85 = arith.index_cast %84 : i32 to index
      %c0_34 = arith.constant 0 : index
      %86 = vector.load %arg10[%85, %c0_34] : memref<104x128xf32, #tpu.memory_space<vmem>>, vector<1x128xf32>
      %87 = arith.index_cast %81 : i32 to index
      %c0_35 = arith.constant 0 : index
      %88 = vector.load %arg14[%87, %c0_35] : memref<64x128xf32, #tpu.memory_space<vmem>>, vector<1x128xf32>
      tpu.vector_store %arg14[%87, %c0_35], %86 {strides = array<i32>} : memref<64x128xf32, #tpu.memory_space<vmem>>, vector<1x128xf32>,
      %c1_i32_36 = arith.constant 1 : i32
      %89 = arith.addi %80, %c1_i32_36 : i32
      %90 = arith.addi %5, %89 : i32
      %91 = arith.index_cast %90 : i32 to index
      %92 = memref.load %arg2[%91] : memref<128xi32, #tpu.memory_space<smem>>
      %93 = arith.index_cast %92 : i32 to index
      %c0_37 = arith.constant 0 : index
      %94 = vector.load %arg10[%93, %c0_37] : memref<104x128xf32, #tpu.memory_space<vmem>>, vector<1x128xf32>
      %95 = arith.index_cast %89 : i32 to index
      %c0_38 = arith.constant 0 : index
      %96 = vector.load %arg14[%95, %c0_38] : memref<64x128xf32, #tpu.memory_space<vmem>>, vector<1x128xf32>
      tpu.vector_store %arg14[%95, %c0_38], %94 {strides = array<i32>} : memref<64x128xf32, #tpu.memory_space<vmem>>, vector<1x128xf32>,
      %c2_i32 = arith.constant 2 : i32
      %97 = arith.addi %80, %c2_i32 : i32
      %98 = arith.addi %5, %97 : i32
      %99 = arith.index_cast %98 : i32 to index
      %100 = memref.load %arg2[%99] : memref<128xi32, #tpu.memory_space<smem>>
      %101 = arith.index_cast %100 : i32 to index
      %c0_39 = arith.constant 0 : index
      %102 = vector.load %arg10[%101, %c0_39] : memref<104x128xf32, #tpu.memory_space<vmem>>, vector<1x128xf32>
      %103 = arith.index_cast %97 : i32 to index
      %c0_40 = arith.constant 0 : index
      %104 = vector.load %arg14[%103, %c0_40] : memref<64x128xf32, #tpu.memory_space<vmem>>, vector<1x128xf32>
      tpu.vector_store %arg14[%103, %c0_40], %102 {strides = array<i32>} : memref<64x128xf32, #tpu.memory_space<vmem>>, vector<1x128xf32>,
      %c3_i32 = arith.constant 3 : i32
      %105 = arith.addi %80, %c3_i32 : i32
      %106 = arith.addi %5, %105 : i32
      %107 = arith.index_cast %106 : i32 to index
      %108 = memref.load %arg2[%107] : memref<128xi32, #tpu.memory_space<smem>>
      %109 = arith.index_cast %108 : i32 to index
      %c0_41 = arith.constant 0 : index
      %110 = vector.load %arg10[%109, %c0_41] : memref<104x128xf32, #tpu.memory_space<vmem>>, vector<1x128xf32>
      %111 = arith.index_cast %105 : i32 to index
      %c0_42 = arith.constant 0 : index
      %112 = vector.load %arg14[%111, %c0_42] : memref<64x128xf32, #tpu.memory_space<vmem>>, vector<1x128xf32>
      tpu.vector_store %arg14[%111, %c0_42], %110 {strides = array<i32>} : memref<64x128xf32, #tpu.memory_space<vmem>>, vector<1x128xf32>,
      %c4_i32 = arith.constant 4 : i32
      %113 = arith.addi %80, %c4_i32 : i32
      %114 = arith.addi %5, %113 : i32
      %115 = arith.index_cast %114 : i32 to index
      %116 = memref.load %arg2[%115] : memref<128xi32, #tpu.memory_space<smem>>
      %117 = arith.index_cast %116 : i32 to index
      %c0_43 = arith.constant 0 : index
      %118 = vector.load %arg10[%117, %c0_43] : memref<104x128xf32, #tpu.memory_space<vmem>>, vector<1x128xf32>
      %119 = arith.index_cast %113 : i32 to index
      %c0_44 = arith.constant 0 : index
      %120 = vector.load %arg14[%119, %c0_44] : memref<64x128xf32, #tpu.memory_space<vmem>>, vector<1x128xf32>
      tpu.vector_store %arg14[%119, %c0_44], %118 {strides = array<i32>} : memref<64x128xf32, #tpu.memory_space<vmem>>, vector<1x128xf32>,
      %c5_i32 = arith.constant 5 : i32
      %121 = arith.addi %80, %c5_i32 : i32
      %122 = arith.addi %5, %121 : i32
      %123 = arith.index_cast %122 : i32 to index
      %124 = memref.load %arg2[%123] : memref<128xi32, #tpu.memory_space<smem>>
      %125 = arith.index_cast %124 : i32 to index
      %c0_45 = arith.constant 0 : index
      %126 = vector.load %arg10[%125, %c0_45] : memref<104x128xf32, #tpu.memory_space<vmem>>, vector<1x128xf32>
      %127 = arith.index_cast %121 : i32 to index
      %c0_46 = arith.constant 0 : index
      %128 = vector.load %arg14[%127, %c0_46] : memref<64x128xf32, #tpu.memory_space<vmem>>, vector<1x128xf32>
      tpu.vector_store %arg14[%127, %c0_46], %126 {strides = array<i32>} : memref<64x128xf32, #tpu.memory_space<vmem>>, vector<1x128xf32>,
      %c6_i32 = arith.constant 6 : i32
      %129 = arith.addi %80, %c6_i32 : i32
      %130 = arith.addi %5, %129 : i32
      %131 = arith.index_cast %130 : i32 to index
      %132 = memref.load %arg2[%131] : memref<128xi32, #tpu.memory_space<smem>>
      %133 = arith.index_cast %132 : i32 to index
      %c0_47 = arith.constant 0 : index
      %134 = vector.load %arg10[%133, %c0_47] : memref<104x128xf32, #tpu.memory_space<vmem>>, vector<1x128xf32>
      %135 = arith.index_cast %129 : i32 to index
      %c0_48 = arith.constant 0 : index
      %136 = vector.load %arg14[%135, %c0_48] : memref<64x128xf32, #tpu.memory_space<vmem>>, vector<1x128xf32>
      tpu.vector_store %arg14[%135, %c0_48], %134 {strides = array<i32>} : memref<64x128xf32, #tpu.memory_space<vmem>>, vector<1x128xf32>,
      %c7_i32 = arith.constant 7 : i32
      %137 = arith.addi %80, %c7_i32 : i32
      %138 = arith.addi %5, %137 : i32
      %139 = arith.index_cast %138 : i32 to index
      %140 = memref.load %arg2[%139] : memref<128xi32, #tpu.memory_space<smem>>
      %141 = arith.index_cast %140 : i32 to index
      %c0_49 = arith.constant 0 : index
      %142 = vector.load %arg10[%141, %c0_49] : memref<104x128xf32, #tpu.memory_space<vmem>>, vector<1x128xf32>
      %143 = arith.index_cast %137 : i32 to index
      %c0_50 = arith.constant 0 : index
      %144 = vector.load %arg14[%143, %c0_50] : memref<64x128xf32, #tpu.memory_space<vmem>>, vector<1x128xf32>
      tpu.vector_store %arg14[%143, %c0_50], %142 {strides = array<i32>} : memref<64x128xf32, #tpu.memory_space<vmem>>, vector<1x128xf32>,
    }
    %c8_i32_3 = arith.constant 8 : i32
    %c0 = arith.constant 0 : index
    %c0_4 = arith.constant 0 : index
    %7 = vector.load %arg14[%c0, %c0_4] : memref<64x128xf32, #tpu.memory_space<vmem>>, vector<64x128xf32>
    %8 = arith.truncf %7 : vector<64x128xf32> to vector<64x128xbf16>
    %c0_5 = arith.constant 0 : index
    %c0_6 = arith.constant 0 : index
    %9 = vector.load %arg11[%c0_5, %c0_6] : memref<128x128xbf16, #tpu.memory_space<vmem>>, vector<128x128xbf16>
    %cst = arith.constant dense<0.000000e+00> : vector<64x128xf32>
    %10 = tpu.matmul %8, %9, %cst {dimension_numbers = #tpu.dot_dimension_numbers<[1], [0], [0], [1], [0, 0, 1, 1], [], []>} : vector<64x128xbf16>, vector<128x128xbf16>, vector<64x128xf32> -> vector<64x128xf32>
    %c0_7 = arith.constant 0 : index
    %c0_8 = arith.constant 0 : index
    %11 = vector.load %arg13[%c0_7, %c0_8] : memref<2x128xf32, #tpu.memory_space<vmem>>, vector<1x128xf32>
    %12 = vector.broadcast %11 : vector<1x128xf32> to vector<64x128xf32>
    %13 = arith.addf %10, %12 : vector<64x128xf32>
    %14 = arith.truncf %13 : vector<64x128xf32> to vector<64x128xbf16>
    %15 = vector.shape_cast %14 : vector<64x128xbf16> to vector<8x8x128xbf16>
    %c0_9 = arith.constant 0 : index
    %c0_10 = arith.constant 0 : index
    %16 = vector.load %arg12[%c0_9, %c0_10] : memref<128x128xbf16, #tpu.memory_space<vmem>>, vector<128x128xbf16>
    %cst_11 = arith.constant dense<0.000000e+00> : vector<64x128xf32>
    %17 = tpu.matmul %8, %16, %cst_11 {dimension_numbers = #tpu.dot_dimension_numbers<[1], [0], [0], [1], [0, 0, 1, 1], [], []>} : vector<64x128xbf16>, vector<128x128xbf16>, vector<64x128xf32> -> vector<64x128xf32>
    %c1 = arith.constant 1 : index
    %c0_12 = arith.constant 0 : index
    %18 = vector.load %arg13[%c1, %c0_12] : memref<2x128xf32, #tpu.memory_space<vmem>>, vector<1x128xf32>
    %19 = vector.broadcast %18 : vector<1x128xf32> to vector<64x128xf32>
    %20 = arith.addf %17, %19 : vector<64x128xf32>
    %21 = arith.truncf %20 : vector<64x128xf32> to vector<64x128xbf16>
    %22 = vector.shape_cast %21 : vector<64x128xbf16> to vector<8x8x128xbf16>
    %23 = tpu.iota {dimensions = array<i32: 1>} : vector<4x128xi32>
    %24 = tpu.iota {dimensions = array<i32: 0>} : vector<4x128xi32>
    %c8_i32_13 = arith.constant 8 : i32
    %25 = vector.broadcast %c8_i32_13 : i32 to vector<4x128xi32>
    %26 = arith.muli %24, %25 : vector<4x128xi32>
    %27 = arith.cmpi sge, %23, %26 : vector<4x128xi32>
    %c1_i32_14 = arith.constant 1 : i32
    %28 = vector.broadcast %c1_i32_14 : i32 to vector<4x128xi32>
    %29 = arith.addi %24, %28 : vector<4x128xi32>
    %c8_i32_15 = arith.constant 8 : i32
    %30 = vector.broadcast %c8_i32_15 : i32 to vector<4x128xi32>
    %31 = arith.muli %29, %30 : vector<4x128xi32>
    %32 = arith.cmpi slt, %23, %31 : vector<4x128xi32>
    %33 = arith.andi %27, %32 : vector<4x128xi1>
    %34 = arith.extui %33 : vector<4x128xi1> to vector<4x128xi32>
    %35 = arith.sitofp %34 : vector<4x128xi32> to vector<4x128xf32>
    %36 = arith.truncf %35 : vector<4x128xf32> to vector<4x128xbf16>
    %c0_16 = arith.constant 0 : index
    %c0_17 = arith.constant 0 : index
    %37 = vector.load %arg3[%c0_16, %c0_17] : memref<8x128xf32, #tpu.memory_space<vmem>>, vector<8x128xf32>
    %38 = arith.truncf %37 : vector<8x128xf32> to vector<8x128xbf16>
    %39 = vector.shape_cast %38 : vector<8x128xbf16> to vector<8x1x128xbf16>
    %40 = vector.shape_cast %36 : vector<4x128xbf16> to vector<1x4x128xbf16>
    %41 = vector.broadcast %39 : vector<8x1x128xbf16> to vector<8x4x128xbf16>
    %42 = vector.broadcast %40 : vector<1x4x128xbf16> to vector<8x4x128xbf16>
    %43 = arith.mulf %41, %42 : vector<8x4x128xbf16>
    "tpu.trace_start"() <{level = 10 : i32, message = "nhm,nlm->nhl"}> : () -> ()
    %cst_18 = arith.constant dense<0.000000e+00> : vector<8x4x8xf32>
    %44 = tpu.matmul %43, %15, %cst_18 {dimension_numbers = #tpu.dot_dimension_numbers<[2], [2], [1], [1], [0, 0, 0, 1, 1, 1], [0], [0]>} : vector<8x4x128xbf16>, vector<8x8x128xbf16>, vector<8x4x8xf32> -> vector<8x4x8xf32>
    "tpu.trace_stop"() : () -> ()
    %c0_19 = arith.constant 0 : index
    %c0_20 = arith.constant 0 : index
    %45 = vector.load %arg4[%c0_19, %c0_20] : memref<8x8xf32, #tpu.memory_space<vmem>>, vector<8x8xf32>
    %cst_21 = arith.constant 0.000000e+00 : f32
    %46 = vector.broadcast %cst_21 : f32 to vector<8x8xf32>
    %47 = arith.cmpf ogt, %45, %46 : vector<8x8xf32>
    %48 = vector.shape_cast %47 : vector<8x8xi1> to vector<8x1x8xi1>
    %cst_22 = arith.constant -1.000000e+30 : f32
    %49 = vector.shape_cast %48 : vector<8x1x8xi1> to vector<8x1x8xi1>
    %50 = vector.broadcast %49 : vector<8x1x8xi1> to vector<8x4x8xi1>
    %51 = vector.broadcast %cst_22 : f32 to vector<8x4x8xf32>
    %52 = arith.select %50, %44, %51 : vector<8x4x8xi1>, vector<8x4x8xf32>
    %cst_23 = arith.constant dense<0xFF800000> : vector<8x4xf32>
    %53 = vector.multi_reduction <maximumf>, %52, %cst_23 [2] : vector<8x4x8xf32> to vector<8x4xf32>
    %54 = vector.shape_cast %53 : vector<8x4xf32> to vector<8x4x1xf32>
    %55 = vector.broadcast %54 : vector<8x4x1xf32> to vector<8x4x8xf32>
    %56 = arith.subf %52, %55 : vector<8x4x8xf32>
    %57 = math.exp %56 : vector<8x4x8xf32>
    %cst_24 = arith.constant 0.000000e+00 : f32
    %58 = vector.shape_cast %48 : vector<8x1x8xi1> to vector<8x1x8xi1>
    %59 = vector.broadcast %58 : vector<8x1x8xi1> to vector<8x4x8xi1>
    %60 = vector.broadcast %cst_24 : f32 to vector<8x4x8xf32>
    %61 = arith.select %59, %57, %60 : vector<8x4x8xi1>, vector<8x4x8xf32>
    %cst_25 = arith.constant dense<0.000000e+00> : vector<8x4xf32>
    %62 = vector.multi_reduction <add>, %61, %cst_25 [2] : vector<8x4x8xf32> to vector<8x4xf32>
    %63 = vector.shape_cast %62 : vector<8x4xf32> to vector<8x4x1xf32>
    %cst_26 = arith.constant 0.000000e+00 : f32
    %64 = vector.broadcast %cst_26 : f32 to vector<8x4x1xf32>
    %65 = arith.cmpf ogt, %63, %64 : vector<8x4x1xf32>
    %cst_27 = arith.constant 1.000000e+00 : f32
    %66 = vector.broadcast %cst_27 : f32 to vector<8x4x1xf32>
    %67 = arith.select %65, %63, %66 : vector<8x4x1xi1>, vector<8x4x1xf32>
    %68 = tpu.reciprocal %67 {approx = true} : vector<8x4x1xf32> -> vector<8x4x1xf32>
    %69 = vector.broadcast %68 : vector<8x4x1xf32> to vector<8x4x8xf32>
    %70 = arith.mulf %61, %69 : vector<8x4x8xf32>
    %71 = arith.truncf %70 : vector<8x4x8xf32> to vector<8x4x8xbf16>
    "tpu.trace_start"() <{level = 10 : i32, message = "nhl,nlm->nhm"}> : () -> ()
    %cst_28 = arith.constant dense<0.000000e+00> : vector<8x4x128xf32>
    %72 = tpu.matmul %71, %22, %cst_28 {dimension_numbers = #tpu.dot_dimension_numbers<[2], [1], [1], [2], [0, 0, 0, 1, 1, 2], [0], [0]>} : vector<8x4x8xbf16>, vector<8x8x128xbf16>, vector<8x4x128xf32> -> vector<8x4x128xf32>
    "tpu.trace_stop"() : () -> ()
    %73 = arith.extui %33 : vector<4x128xi1> to vector<4x128xi32>
    %74 = arith.sitofp %73 : vector<4x128xi32> to vector<4x128xf32>
    %75 = vector.shape_cast %74 : vector<4x128xf32> to vector<1x4x128xf32>
    %76 = vector.broadcast %75 : vector<1x4x128xf32> to vector<8x4x128xf32>
    %77 = arith.mulf %72, %76 : vector<8x4x128xf32>
    %cst_29 = arith.constant dense<0.000000e+00> : vector<8x128xf32>
    %78 = vector.multi_reduction <add>, %77, %cst_29 [1] : vector<8x4x128xf32> to vector<8x128xf32>
    %c0_30 = arith.constant 0 : index
    %c0_31 = arith.constant 0 : index
    %79 = vector.load %arg9[%c0_30, %c0_31] : memref<8x128xf32, #tpu.memory_space<vmem>>, vector<8x128xf32>
    tpu.vector_store %arg9[%c0_30, %c0_31], %78 {strides = array<i32>} : memref<8x128xf32, #tpu.memory_space<vmem>>, vector<8x128xf32>,
    return
  }
  func.func @transform_0(%arg0: i32, %arg1: i32, %arg2: memref<128xi32, #tpu.memory_space<smem>>) -> (i32, i32) {
    %c1_i32 = arith.constant 1 : i32
    %0 = arith.muli %arg0, %c1_i32 : i32
    %1 = arith.addi %0, %arg1 : i32
    %c0_i32 = arith.constant 0 : i32
    %c0_i32_0 = arith.constant 0 : i32
    return %1, %c0_i32 : i32, i32
  }
  func.func @transform_1(%arg0: i32, %arg1: i32, %arg2: memref<128xi32, #tpu.memory_space<smem>>) -> (i32, i32) {
    %c1_i32 = arith.constant 1 : i32
    %0 = arith.muli %arg0, %c1_i32 : i32
    %1 = arith.addi %0, %arg1 : i32
    %c0_i32 = arith.constant 0 : i32
    %c0_i32_0 = arith.constant 0 : i32
    return %1, %c0_i32 : i32, i32
  }
  func.func @transform_6(%arg0: i32, %arg1: i32, %arg2: memref<128xi32, #tpu.memory_space<smem>>) -> (i32, i32) {
    %c1_i32 = arith.constant 1 : i32
    %0 = arith.muli %arg0, %c1_i32 : i32
    %1 = arith.addi %0, %arg1 : i32
    %c0_i32 = arith.constant 0 : i32
    %c0_i32_0 = arith.constant 0 : i32
    return %1, %c0_i32 : i32, i32
  }
}

</mosaic_0001>

<llo_original>
// kernel: tpu_custom_call.1
$region0: #{tpu_custom_call.1}
  #allocation0 [shape = 'u32[]', space=smem, size = 0x4, offset = 0x4, fixed_abs, tag = 'smem constant byte address 0x4 - core index']
  #allocation1 [shape = 'u32[72,128]{1,0:T(1,128)}', space=vmem, size = 0x9000, scoped, tag = 'internal scratch']
  #allocation2 [shape = 'f32[104,128]{1,0:T(8,128)}', space=vmem, size = 0xd000, scoped, tag = 'scratch operand']
  #allocation3 [shape = 'bf16[128,128]{1,0:T(8,128)(2,1)}', space=vmem, size = 0x8000, scoped, tag = 'scratch operand']
  #allocation4 [shape = 'bf16[128,128]{1,0:T(8,128)(2,1)}', space=vmem, size = 0x8000, scoped, tag = 'scratch operand']
  #allocation5 [shape = 'f32[2,128]{1,0:T(2,128)}', space=vmem, size = 0x400, scoped, tag = 'scratch operand']
  #allocation6 [shape = 'f32[64,128]{1,0:T(8,128)}', space=vmem, size = 0x8000, scoped, tag = 'scratch operand']
  #allocation7 [shape = 's32[4]{0}', space=sflag, size = 0x10, scoped, tag = 'scratch operand']
  #allocation8 [shape = 's32[1]{0}', space=sflag, size = 0x4, scoped, tag = 'scoped memory for tpu_custom_call.1']
  #allocation9 [shape = 'u8[512]{0}', space=smem, size = 0x200, scoped, tag = 'prefetched SMEM operand 0']
  #allocation12 [shape = 's32[]', space=sflag, size = 0x4, offset = 0, fixed_abs, tag = 'sflag constant byte address 0x0 - dummy sync flag']
  #allocation13 [shape = 's32[]', space=sflag, size = 0x4, offset = 0, fixed_abs, tag = 'sflag constant byte address 0x0 - dummy sync flag']
  #allocation14 [shape = 'u32[]', space=smem, size = 0x4, offset = 0x44, fixed_abs, tag = 'smem constant byte address 0x44 - assertion arg 0']
  #allocation15 [shape = 'u32[]', space=smem, size = 0x4, offset = 0x48, fixed_abs, tag = 'smem constant byte address 0x48 - assertion arg 1']
  #allocation16 [shape = 's32[]', space=sflag, size = 0x4, offset = 0, fixed_abs, tag = 'sflag constant byte address 0x0 - dummy sync flag']
  #allocation17 [shape = 's32[]', space=sflag, size = 0x4, offset = 0, fixed_abs, tag = 'sflag constant byte address 0x0 - dummy sync flag']
  #allocation18 [shape = 's32[]', space=sflag, size = 0x4, offset = 0, fixed_abs, tag = 'sflag constant byte address 0x0 - dummy sync flag']
  #allocation19 [shape = 's32[]', space=sflag, size = 0x4, offset = 0, fixed_abs, tag = 'sflag constant byte address 0x0 - dummy sync flag']
  #allocation20 [shape = 's32[]', space=sflag, size = 0x4, offset = 0, fixed_abs, tag = 'sflag constant byte address 0x0 - dummy sync flag']
  %s0 = inlined_call_operand.vmem [shape: s32[128], index: 0, kind: input, shape index: {}]
  %s1 = inlined_call_operand.vmem [shape: f32[16,128], index: 1, kind: input, shape index: {}]
  %s2 = inlined_call_operand.vmem [shape: f32[16,8], index: 2, kind: input, shape index: {}]
  %s3 = inlined_call_operand.hbm [shape: f32[104,128], index: 3, kind: input, shape index: {}]
  %s4 = inlined_call_operand.hbm [shape: bf16[128,128], index: 4, kind: input, shape index: {}]
  %s5 = inlined_call_operand.hbm [shape: bf16[128,128], index: 5, kind: input, shape index: {}]
  %s6 = inlined_call_operand.vmem [shape: f32[2,128], index: 6, kind: input, shape index: {}]
  %s7 = inlined_call_operand.hbm [shape: f32[16,128], index: 7, kind: output, shape index: {}]
  %s8 = sld [smem:[#allocation0]]
  $region94: #{tpu_custom_call.1} parent=0
    _
  %s10 = ssub.s32 1, %s8
  %s11 = scalar_select 0, %s10, %s8
  %s13 = sshll.u32 %s0, 4
  %s14 = int_to_ptr.vmem [resolvable:$true] %s13
  %16 = dma.vmem_to_smem %s14, 16, [#allocation9], [#allocation8]
  %18 = dma.done [#allocation8], 16
  %19 = sfence
  $region1: #{tpu_custom_call.1} parent=0
    #allocation10 [shape = 'u8[8192]{0}', space=vmem, size = 0x2000, scoped, tag = 'output window, operand 0']
    #allocation11 [shape = 's32[2]{0}', space=sflag, size = 0x8, scoped, tag = 'scoped memory for tpu_custom_call.1']
    %20 = vsyncpa [#allocation11], 0
    %s21 = scalar_lea.sflag [#allocation11], 1
    %22 = vsyncpa %s21, 0
    loop: start=0, step=1, limit=4
    $region2: #{tpu_custom_call.1} parent=1 // loop_pre_header
      _
    $region3: #{tpu_custom_call.1} parent=1 // loop_header
      %s24 = sphi 0, %s28
      %p25 = scmp.ge.s32.totalorder %s24, 4
      %s31 = sphi 0, %s43
      %s32 = sphi 0, %s39
      %s33 = sphi 0, %s31
      %s34 = sphi 0, %s32
      %s35 = sphi 0, %s33
      %s36 = sphi 0, %s34
      %s48 = sphi 0, %s50
      %s51 = sphi 0, %s48
      %s52 = sphi 0, %s51
      %s68 = sphi 0, %s52
      %s76 = sphi 0, %s78
      %s79 = sphi 0, %s76
      %s80 = sphi 0, %s79
      %s96 = sphi 0, %s80
      %s104 = sphi 0, %s106
      %s107 = sphi 0, %s104
      %s108 = sphi 0, %s107
      %s124 = sphi 0, %s108
    $region4: #{tpu_custom_call.1} parent=1 // loop_header_branch
      %27 = sbr.rel (%p25) target = $region8
    $region5: #{tpu_custom_call.1} parent=1 // loop_body
      %s29 = ssub.s32 %s24, 1
      %s30 = ssub.s32 %s24, 2
      %s37 = sadd.s32 1, %s32
      %p38 = scmp.ge.s32.totalorder %s37, 1
      %s39 = scalar_select %p38, 0, %s37
      %s40 = sadd.s32 1, %s31
      %s41 = scalar_select %p38, %s40, %s31
      %p42 = scmp.ge.s32.totalorder %s41, 2
      %s43 = scalar_select %p42, 0, %s41
      %s44 = sadd.s32 %s31, %s32
      %s45 = sadd.s32 %s43, %s39
      %s46 = ssub.s32 %s44, %s45
      %p47 = scmp.eq.s32.totalorder %s46, 0
      %s49 = sadd.s32 %s48, 1
      %s50 = scalar_select %p47, %s48, %s49
      %p53 = pneg %p47
      %p54 = scmp.eq.s32.totalorder %s24, 1
      %p55 = por %p53, %p54
      %p56 = scmp.ne.s32.totalorder %s48, %s51
      %p57 = scmp.eq.s32.totalorder %s24, 0
      %p58 = por %p56, %p57
      %p59 = scmp.ne.s32.totalorder %s48, %s51
      %p60 = scmp.eq.s32.totalorder %s29, 1
      %p61 = por %p59, %p60
      %p62 = scmp.ne.s32.totalorder %s51, %s52
      %p63 = scmp.eq.s32.totalorder %s29, 0
      %p64 = por %p62, %p63
      %p65 = scmp.ne.s32.totalorder %s51, %s52
      %p66 = scmp.eq.s32.totalorder %s30, 1
      %p67 = por %p65, %p66
      %p69 = scmp.ne.s32.totalorder %s52, %s68
      %p70 = scmp.eq.s32.totalorder %s30, 0
      %p71 = por %p69, %p70
      %s72 = sadd.s32 %s31, %s32
      %s73 = sadd.s32 %s43, %s39
      %s74 = ssub.s32 %s72, %s73
      %p75 = scmp.eq.s32.totalorder %s74, 0
      %s77 = sadd.s32 %s76, 1
      %s78 = scalar_select %p75, %s76, %s77
      %p81 = pneg %p75
      %p82 = scmp.eq.s32.totalorder %s24, 1
      %p83 = por %p81, %p82
      %p84 = scmp.ne.s32.totalorder %s76, %s79
      %p85 = scmp.eq.s32.totalorder %s24, 0
      %p86 = por %p84, %p85
      %p87 = scmp.ne.s32.totalorder %s76, %s79
      %p88 = scmp.eq.s32.totalorder %s29, 1
      %p89 = por %p87, %p88
      %p90 = scmp.ne.s32.totalorder %s79, %s80
      %p91 = scmp.eq.s32.totalorder %s29, 0
      %p92 = por %p90, %p91
      %p93 = scmp.ne.s32.totalorder %s79, %s80
      %p94 = scmp.eq.s32.totalorder %s30, 1
      %p95 = por %p93, %p94
      %p97 = scmp.ne.s32.totalorder %s80, %s96
      %p98 = scmp.eq.s32.totalorder %s30, 0
      %p99 = por %p97, %p98
      %s100 = sadd.s32 %s31, %s32
      %s101 = sadd.s32 %s43, %s39
      %s102 = ssub.s32 %s100, %s101
      %p103 = scmp.eq.s32.totalorder %s102, 0
      %s105 = sadd.s32 %s104, 1
      %s106 = scalar_select %p103, %s104, %s105
      %p109 = pneg %p103
      %p110 = scmp.eq.s32.totalorder %s24, 1
      %p111 = por %p109, %p110
      %p112 = scmp.ne.s32.totalorder %s104, %s107
      %p113 = scmp.eq.s32.totalorder %s24, 0
      %p114 = por %p112, %p113
      %p115 = scmp.ne.s32.totalorder %s104, %s107
      %p116 = scmp.eq.s32.totalorder %s29, 1
      %p117 = por %p115, %p116
      %p118 = scmp.ne.s32.totalorder %s107, %s108
      %p119 = scmp.eq.s32.totalorder %s29, 0
      %p120 = por %p118, %p119
      %p121 = scmp.ne.s32.totalorder %s107, %s108
      %p122 = scmp.eq.s32.totalorder %s30, 1
      %p123 = por %p121, %p122
      %p125 = scmp.ne.s32.totalorder %s108, %s124
      %p126 = scmp.eq.s32.totalorder %s30, 0
      %p127 = por %p125, %p126
      %p128 = scmp.le.s32.totalorder 1, %s24
      %p129 = scmp.lt.s32.totalorder %s24, 3
      %p130 = pnand %p128, %p129
      %p131 = pneg %p130
      // Predicated region
      $region9: #{tpu_custom_call.1} parent=5 // pred_check
        _
      $region10: #{tpu_custom_call.1} parent=5 // pred_check_branch
        %133 = sbr.rel (%p130) target = $region12
      $region11: #{tpu_custom_call.1} parent=5 // pred_region
        %s134 = ssub.s32 %s24, 1
      $region12: #{tpu_custom_call.1} parent=5 // pred_fallthru
        _
      %p135 = scmp.lt.s32.totalorder %s24, 2
      // Predicated region
      $region13: #{tpu_custom_call.1} parent=5 // pred_check
        %p136 = pneg %p135
      $region14: #{tpu_custom_call.1} parent=5 // pred_check_branch
        %138 = sbr.rel (%p136) target = $region16
      $region15: #{tpu_custom_call.1} parent=5 // pred_region
        // Predicated region
        $region17: #{tpu_custom_call.1} parent=15 // pred_check
          %p139 = pneg %p58
        $region18: #{tpu_custom_call.1} parent=15 // pred_check_branch
          %141 = sbr.rel (%p139) target = $region20
        $region19: #{tpu_custom_call.1} parent=15 // pred_region
          %s142 = sadd.s32 %s31, %s32
          %p143 = scmp.lt.s32.totalorder %s142, 1
          %s144 = scalar_select %p143, %s142, 1
          %s145 = smul.addr %s144, 8
          %s146 = scalar_lea.vmem %s1, %s145
          %s147 = sadd.s32 %s31, %s32
        $region20: #{tpu_custom_call.1} parent=15 // pred_fallthru
          _
        // Predicated region
        $region21: #{tpu_custom_call.1} parent=15 // pred_check
          %p148 = pneg %p86
        $region22: #{tpu_custom_call.1} parent=15 // pred_check_branch
          %150 = sbr.rel (%p148) target = $region24
        $region23: #{tpu_custom_call.1} parent=15 // pred_region
          %s151 = sadd.s32 %s31, %s32
          %p152 = scmp.lt.s32.totalorder %s151, 1
          %s153 = scalar_select %p152, %s151, 1
          %s154 = smul.addr %s153, 8
          %s155 = scalar_lea.vmem %s2, %s154
          %s156 = sadd.s32 %s31, %s32
        $region24: #{tpu_custom_call.1} parent=15 // pred_fallthru
          _
      $region16: #{tpu_custom_call.1} parent=5 // pred_fallthru
        _
      %p157 = scmp.le.s32.totalorder 1, %s24
      %p158 = scmp.lt.s32.totalorder %s24, 3
      %p159 = pnand %p157, %p158
      %p160 = pneg %p159
      // Predicated region
      $region25: #{tpu_custom_call.1} parent=5 // pred_check
        _
      $region26: #{tpu_custom_call.1} parent=5 // pred_check_branch
        %162 = sbr.rel (%p159) target = $region28
      $region27: #{tpu_custom_call.1} parent=5 // pred_region
        %s163 = ssub.s32 %s24, 1
        %s164 = sadd.s32 %s33, %s34
        %p165 = scmp.lt.s32.totalorder %s164, 1
        %s166 = scalar_select %p165, %s164, 1
        %s167 = smul.addr %s166, 8
        %s168 = scalar_lea.vmem %s1, %s167
        %p169 = pneg %p64
        %p170 = pneg %p61
        %s171 = sadd.s32 %s33, %s34
        %p172 = scmp.lt.s32.totalorder %s171, 1
        %s173 = scalar_select %p172, %s171, 1
        %s174 = smul.addr %s173, 8
        %s175 = scalar_lea.vmem %s2, %s174
        %p176 = pneg %p92
        %p177 = pneg %p89
        %p178 = pneg %p120
        %p179 = pneg %p117
        %s180 = sand.u32 %s107, 1
        %s181 = scalar_lea.sflag [#allocation11], %s180
        %s182 = sand.u32 %s107, 1
        %s183 = smul.addr %s182, 8
        %s184 = scalar_lea.vmem [#allocation10], %s183
        %s185 = sadd.s32 %s33, %s34
        %p186 = scmp.lt.s32.totalorder %s185, 1
        %s187 = scalar_select %p186, %s185, 1
        %s188 = smul.addr %s187, 8
        %s189 = scalar_lea.vmem %s1, %s188
        %s190 = sadd.s32 %s33, %s34
        %s191 = sadd.s32 %s33, %s34
        %p192 = scmp.lt.s32.totalorder %s191, 1
        %s193 = scalar_select %p192, %s191, 1
        %s194 = smul.addr %s193, 8
        %s195 = scalar_lea.vmem %s2, %s194
        %s196 = sadd.s32 %s33, %s34
        %s197 = sadd.s32 %s33, %s34
        %p199 = scmp.eq.s32.totalorder %s34, 0
        // Predicated region
        $region29: #{tpu_custom_call.1} parent=27 // pred_check
          %p200 = pneg %p199
        $region30: #{tpu_custom_call.1} parent=27 // pred_check_branch
          %202 = sbr.rel (%p200) target = $region32
        $region31: #{tpu_custom_call.1} parent=27 // pred_region
          // Predicated region
          $region33: #{tpu_custom_call.1} parent=31 // pred_check
            _
          $region34: #{tpu_custom_call.1} parent=31 // pred_check_branch
            %204 = sbr.rel target = $region36
          $region35: #{tpu_custom_call.1} parent=31 // pred_region
            %205 = sst [smem:[#allocation14]] [#allocation13]
            %206 = sst [smem:[#allocation15]] [#allocation12]
          $region36: #{tpu_custom_call.1} parent=31 // pred_fallthru
            _
          %208 = shalt.err (0)
          %s210 = sshll.u32 %s3, 4
          %s211 = int_to_ptr.hbm [resolvable:$true] %s210
          %s212 = sshll.u32 [#allocation2], 4
          %s213 = int_to_ptr.vmem [resolvable:$true] %s212
          %215 = dma.hbm_to_vmem [thread:$0]  %s211, 1664, %s213, [#allocation7]
          %s216 = scalar_lea.sflag [#allocation7], 1
          // Predicated region
          $region37: #{tpu_custom_call.1} parent=31 // pred_check
            _
          $region38: #{tpu_custom_call.1} parent=31 // pred_check_branch
            %218 = sbr.rel target = $region40
          $region39: #{tpu_custom_call.1} parent=31 // pred_region
            %219 = sst [smem:[#allocation14]] [#allocation17]
            %220 = sst [smem:[#allocation15]] [#allocation16]
          $region40: #{tpu_custom_call.1} parent=31 // pred_fallthru
            _
          %222 = shalt.err (0)
          %s224 = sshll.u32 %s4, 4
          %s225 = int_to_ptr.hbm [resolvable:$true] %s224
          %s226 = sshll.u32 [#allocation3], 4
          %s227 = int_to_ptr.vmem [resolvable:$true] %s226
          %229 = dma.hbm_to_vmem [thread:$0]  %s225, 1024, %s227, %s216
          %s230 = scalar_lea.sflag [#allocation7], 2
          // Predicated region
          $region41: #{tpu_custom_call.1} parent=31 // pred_check
            _
          $region42: #{tpu_custom_call.1} parent=31 // pred_check_branch
            %232 = sbr.rel target = $region44
          $region43: #{tpu_custom_call.1} parent=31 // pred_region
            %233 = sst [smem:[#allocation14]] [#allocation19]
            %234 = sst [smem:[#allocation15]] [#allocation18]
          $region44: #{tpu_custom_call.1} parent=31 // pred_fallthru
            _
          %236 = shalt.err (0)
          %s238 = sshll.u32 %s5, 4
          %s239 = int_to_ptr.hbm [resolvable:$true] %s238
          %s240 = sshll.u32 [#allocation4], 4
          %s241 = int_to_ptr.vmem [resolvable:$true] %s240
          %243 = dma.hbm_to_vmem [thread:$0]  %s239, 1024, %s241, %s230
          %s244 = scalar_lea.sflag [#allocation7], 3
          // Predicated region
          $region45: #{tpu_custom_call.1} parent=31 // pred_check
            _
          $region46: #{tpu_custom_call.1} parent=31 // pred_check_branch
            %246 = sbr.rel target = $region48
          $region47: #{tpu_custom_call.1} parent=31 // pred_region
            // Predicated region
            $region60: #{tpu_custom_call.1} parent=47 // pred_check
              _
            $region61: #{tpu_custom_call.1} parent=47 // pred_check_branch
              %262 = sbr.rel (0) target = $region63
            $region62: #{tpu_custom_call.1} parent=47 // pred_region
              %s264 = ssub.s32 4, 1
              loop: start=0, step=1, limit=1
              $region64: #{tpu_custom_call.1} parent=62 // loop_pre_header
                _
              $region65: #{tpu_custom_call.1} parent=62 // loop_header
                %s266 = sphi 0, %s270
                %p267 = scmp.ge.s32.totalorder %s266, 1
                %s271 = sphi %s6, %s6
                %s272 = sphi [#allocation5], [#allocation5]
              $region66: #{tpu_custom_call.1} parent=62 // loop_header_branch
                %269 = sbr.rel (%p267) target = $region70
              $region67: #{tpu_custom_call.1} parent=62 // loop_body
                %v273 = vld [vmem:[%s271] sm:%s264]
                %274 = vst [vmem:[%s272] sm:%s264] %v273
              $region68: #{tpu_custom_call.1} parent=62 // loop_footer
                %s270 = sadd.s32 1, %s266
              $region69: #{tpu_custom_call.1} parent=62 // loop_footer_branch
                %265 = sbr.rel target = $region65
              $region70: #{tpu_custom_call.1} parent=62 // loop_exit
                _
            $region63: #{tpu_custom_call.1} parent=47 // pred_fallthru
              _
          $region48: #{tpu_custom_call.1} parent=31 // pred_fallthru
            _
          // Predicated region
          $region49: #{tpu_custom_call.1} parent=31 // pred_check
            _
          $region50: #{tpu_custom_call.1} parent=31 // pred_check_branch
            %248 = sbr.rel (0) target = $region52
          $region51: #{tpu_custom_call.1} parent=31 // pred_region
            %s250 = ssub.s32 4, 1
            loop: start=0, step=1, limit=1
            $region53: #{tpu_custom_call.1} parent=51 // loop_pre_header
              _
            $region54: #{tpu_custom_call.1} parent=51 // loop_header
              %s252 = sphi 0, %s256
              %p253 = scmp.ge.s32.totalorder %s252, 1
              %s257 = sphi %s6, %s6
              %s258 = sphi [#allocation5], [#allocation5]
            $region55: #{tpu_custom_call.1} parent=51 // loop_header_branch
              %255 = sbr.rel (%p253) target = $region59
            $region56: #{tpu_custom_call.1} parent=51 // loop_body
              %v259 = vld [vmem:[%s257] sm:%s250]
              %260 = vst [vmem:[%s258] sm:%s250] %v259
            $region57: #{tpu_custom_call.1} parent=51 // loop_footer
              %s256 = sadd.s32 1, %s252
            $region58: #{tpu_custom_call.1} parent=51 // loop_footer_branch
              %251 = sbr.rel target = $region54
            $region59: #{tpu_custom_call.1} parent=51 // loop_exit
              _
          $region52: #{tpu_custom_call.1} parent=31 // pred_fallthru
            _
          // Predicated region
          $region71: #{tpu_custom_call.1} parent=31 // pred_check
            _
          $region72: #{tpu_custom_call.1} parent=31 // pred_check_branch
            %277 = sbr.rel (0) target = $region74
          $region73: #{tpu_custom_call.1} parent=31 // pred_region
            %278 = vsyncadd %s244, 32
          $region74: #{tpu_custom_call.1} parent=31 // pred_fallthru
            _
          %s279 = smul.u32 104, 1
          %s280 = sshll.u32 %s279, 4
          %281 = dma.done [#allocation7], %s280
          %s282 = smul.u32 4, 16
          %s283 = smul.u32 %s282, 1
          %s284 = sshll.u32 %s283, 4
          %285 = dma.done %s216, %s284
          %s286 = sshll.u32 %s283, 4
          %287 = dma.done %s230, %s286
          %s288 = smul.u32 2, 1
          %s289 = sshll.u32 %s288, 4
          %290 = dma.done %s244, %s289
        $region32: #{tpu_custom_call.1} parent=27 // pred_fallthru
          _
        %s291 = sadd.s32 %s33, %s34
        %s292 = smul.u32 %s291, 64
        loop: start=0, step=1, limit=8
        $region75: #{tpu_custom_call.1} parent=27 // loop_pre_header
          _
        $region76: #{tpu_custom_call.1} parent=27 // loop_header
          %s294 = sphi 0, %s298
          %p295 = scmp.ge.s32.totalorder %s294, 8
        $region77: #{tpu_custom_call.1} parent=27 // loop_header_branch
          %297 = sbr.rel (%p295) target = $region81
        $region78: #{tpu_custom_call.1} parent=27 // loop_body
          %s299 = smul.u32 %s294, 8
          %s300 = sadd.s32 %s292, %s299
          %s301 = sld [smem:[#allocation9 + %s300]]
          %s302 = scalar_lea.vmem [#allocation2], %s301
          %v303 = vld [vmem:[%s302] sm:$0x1]
          %s304 = scalar_lea.vmem [#allocation6], %s299
          %305 = vst [vmem:[%s304] sm:$0x1] %v303
          %s306 = sadd.s32 %s299, 1
          %s307 = sadd.s32 %s292, %s306
          %s308 = sld [smem:[#allocation9 + %s307]]
          %s309 = scalar_lea.vmem [#allocation2], %s308
          %v310 = vld [vmem:[%s309] sm:$0x1]
          %s311 = scalar_lea.vmem [#allocation6], %s306
          %312 = vst [vmem:[%s311] sm:$0x1] %v310
          %s313 = sadd.s32 %s299, 2
          %s314 = sadd.s32 %s292, %s313
          %s315 = sld [smem:[#allocation9 + %s314]]
          %s316 = scalar_lea.vmem [#allocation2], %s315
          %v317 = vld [vmem:[%s316] sm:$0x1]
          %s318 = scalar_lea.vmem [#allocation6], %s313
          %319 = vst [vmem:[%s318] sm:$0x1] %v317
          %s320 = sadd.s32 %s299, 3
          %s321 = sadd.s32 %s292, %s320
          %s322 = sld [smem:[#allocation9 + %s321]]
          %s323 = scalar_lea.vmem [#allocation2], %s322
          %v324 = vld [vmem:[%s323] sm:$0x1]
          %s325 = scalar_lea.vmem [#allocation6], %s320
          %326 = vst [vmem:[%s325] sm:$0x1] %v324
          %s327 = sadd.s32 %s299, 4
          %s328 = sadd.s32 %s292, %s327
          %s329 = sld [smem:[#allocation9 + %s328]]
          %s330 = scalar_lea.vmem [#allocation2], %s329
          %v331 = vld [vmem:[%s330] sm:$0x1]
          %s332 = scalar_lea.vmem [#allocation6], %s327
          %333 = vst [vmem:[%s332] sm:$0x1] %v331
          %s334 = sadd.s32 %s299, 5
          %s335 = sadd.s32 %s292, %s334
          %s336 = sld [smem:[#allocation9 + %s335]]
          %s337 = scalar_lea.vmem [#allocation2], %s336
          %v338 = vld [vmem:[%s337] sm:$0x1]
          %s339 = scalar_lea.vmem [#allocation6], %s334
          %340 = vst [vmem:[%s339] sm:$0x1] %v338
          %s341 = sadd.s32 %s299, 6
          %s342 = sadd.s32 %s292, %s341
          %s343 = sld [smem:[#allocation9 + %s342]]
          %s344 = scalar_lea.vmem [#allocation2], %s343
          %v345 = vld [vmem:[%s344] sm:$0x1]
          %s346 = scalar_lea.vmem [#allocation6], %s341
          %347 = vst [vmem:[%s346] sm:$0x1] %v345
          %s348 = sadd.s32 %s299, 7
          %s349 = sadd.s32 %s292, %s348
          %s350 = sld [smem:[#allocation9 + %s349]]
          %s351 = scalar_lea.vmem [#allocation2], %s350
          %v352 = vld [vmem:[%s351] sm:$0x1]
          %s353 = scalar_lea.vmem [#allocation6], %s348
          %354 = vst [vmem:[%s353] sm:$0x1] %v352
        $region79: #{tpu_custom_call.1} parent=27 // loop_footer
          %s298 = sadd.s32 1, %s294
        $region80: #{tpu_custom_call.1} parent=27 // loop_footer_branch
          %293 = sbr.rel target = $region76
        $region81: #{tpu_custom_call.1} parent=27 // loop_exit
          _
        %v355 = vld [vmem:[#allocation6] sm:$0xff]
        %v356 = vld [vmem:[#allocation6 + $0x8] sm:$0xff]
        %v357 = vld [vmem:[#allocation6 + $0x10] sm:$0xff]
        %v358 = vld [vmem:[#allocation6 + $0x18] sm:$0xff]
        %v359 = vld [vmem:[#allocation6 + $0x20] sm:$0xff]
        %v360 = vld [vmem:[#allocation6 + $0x28] sm:$0xff]
        %v361 = vld [vmem:[#allocation6 + $0x30] sm:$0xff]
        %v362 = vld [vmem:[#allocation6 + $0x38] sm:$0xff]
        %v363 = vpack.c.bf16 %v356, %v355
        %v364 = vpack.c.bf16 %v358, %v357
        %v365 = vpack.c.bf16 %v360, %v359
        %v366 = vpack.c.bf16 %v362, %v361
        %v367 = vld [vmem:[#allocation3] sm:$0xf]
        %v368 = vld [vmem:[#allocation3 + $0x4] sm:$0xf]
        %v369 = vld [vmem:[#allocation3 + $0x8] sm:$0xf]
        %v370 = vld [vmem:[#allocation3 + $0xc] sm:$0xf]
        %v371 = vld [vmem:[#allocation3 + $0x10] sm:$0xf]
        %v372 = vld [vmem:[#allocation3 + $0x14] sm:$0xf]
        %v373 = vld [vmem:[#allocation3 + $0x18] sm:$0xf]
        %v374 = vld [vmem:[#allocation3 + $0x1c] sm:$0xf]
        %v375 = vld [vmem:[#allocation3 + $0x20] sm:$0xf]
        %v376 = vld [vmem:[#allocation3 + $0x24] sm:$0xf]
        %v377 = vld [vmem:[#allocation3 + $0x28] sm:$0xf]
        %v378 = vld [vmem:[#allocation3 + $0x2c] sm:$0xf]
        %v379 = vld [vmem:[#allocation3 + $0x30] sm:$0xf]
        %v380 = vld [vmem:[#allocation3 + $0x34] sm:$0xf]
        %v381 = vld [vmem:[#allocation3 + $0x38] sm:$0xf]
        %v382 = vld [vmem:[#allocation3 + $0x3c] sm:$0xf]
        %v383 = vld [vmem:[#allocation5] sm:$0x1]
        %v384 = vperm.slane %v383, 0
        %v401 = vunpack.c.l.b16 %v367
        %v402 = vunpack.c.l.b16 %v368
        %v403 = vunpack.c.l.b16 %v369
        %v404 = vunpack.c.l.b16 %v370
        %v405 = vunpack.c.l.b16 %v371
        %v406 = vunpack.c.l.b16 %v372
        %v407 = vunpack.c.l.b16 %v373
        %v408 = vunpack.c.l.b16 %v374
        %v409 = vunpack.c.l.b16 %v375
        %v410 = vunpack.c.l.b16 %v376
        %v411 = vunpack.c.l.b16 %v377
        %v412 = vunpack.c.l.b16 %v378
        %v413 = vunpack.c.l.b16 %v379
        %v414 = vunpack.c.l.b16 %v380
        %v415 = vunpack.c.l.b16 %v381
        %v416 = vunpack.c.l.b16 %v382
        %v417 = vpack.c.b16 %v402, %v401
        %v418 = vpack.c.b16 %v404, %v403
        %v419 = vpack.c.b16 %v406, %v405
        %v420 = vpack.c.b16 %v408, %v407
        %v421 = vpack.c.b16 %v410, %v409
        %v422 = vpack.c.b16 %v412, %v411
        %v423 = vpack.c.b16 %v414, %v413
        %v424 = vpack.c.b16 %v416, %v415
        %433 = vmatpush.bf16.msra.mxu0 %v424
        %434 = vmatpush.bf16.msra.mxu0 %v423
        %435 = vmatpush.bf16.msra.mxu0 %v422
        %436 = vmatpush.bf16.msra.mxu0 %v421
        %437 = vmatpush.bf16.msra.mxu0 %v420
        %438 = vmatpush.bf16.msra.mxu0 %v419
        %439 = vmatpush.bf16.msra.mxu0 %v418
        %440 = vmatpush.bf16.msra.mxu0 %v417
        %441 = vmatmul.bf16.gmra.mxu0 %v363
        %v442 = vpop.f32.mrf.mxu0
        %v443 = vadd.f32 %v384, %v442
        %v444 = vpop.f32.mrf.mxu0
        %v445 = vadd.f32 %v384, %v444
        %446 = vmatmul.bf16.gmra.mxu0 %v364
        %v447 = vpop.f32.mrf.mxu0
        %v448 = vadd.f32 %v384, %v447
        %v449 = vpop.f32.mrf.mxu0
        %v450 = vadd.f32 %v384, %v449
        %451 = vmatmul.bf16.gmra.mxu0 %v365
        %v452 = vpop.f32.mrf.mxu0
        %v453 = vadd.f32 %v384, %v452
        %v454 = vpop.f32.mrf.mxu0
        %v455 = vadd.f32 %v384, %v454
        %456 = vmatmul.bf16.gmra.mxu0 %v366
        %v457 = vpop.f32.mrf.mxu0
        %v458 = vadd.f32 %v384, %v457
        %v459 = vpop.f32.mrf.mxu0
        %v460 = vadd.f32 %v384, %v459
        %461 = vdwg.mxu0
        %v462 = vpack.c.bf16 %v443, %v443
        %v463 = vpack.c.bf16 %v445, %v445
        %v464 = vpack.c.bf16 %v448, %v448
        %v465 = vpack.c.bf16 %v450, %v450
        %v466 = vpack.c.bf16 %v453, %v453
        %v467 = vpack.c.bf16 %v455, %v455
        %v468 = vpack.c.bf16 %v458, %v458
        %v469 = vpack.c.bf16 %v460, %v460
        %v470 = vld [vmem:[#allocation4] sm:$0xf]
        %v471 = vld [vmem:[#allocation4 + $0x4] sm:$0xf]
        %v472 = vld [vmem:[#allocation4 + $0x8] sm:$0xf]
        %v473 = vld [vmem:[#allocation4 + $0xc] sm:$0xf]
        %v474 = vld [vmem:[#allocation4 + $0x10] sm:$0xf]
        %v475 = vld [vmem:[#allocation4 + $0x14] sm:$0xf]
        %v476 = vld [vmem:[#allocation4 + $0x18] sm:$0xf]
        %v477 = vld [vmem:[#allocation4 + $0x1c] sm:$0xf]
        %v478 = vld [vmem:[#allocation4 + $0x20] sm:$0xf]
        %v479 = vld [vmem:[#allocation4 + $0x24] sm:$0xf]
        %v480 = vld [vmem:[#allocation4 + $0x28] sm:$0xf]
        %v481 = vld [vmem:[#allocation4 + $0x2c] sm:$0xf]
        %v482 = vld [vmem:[#allocation4 + $0x30] sm:$0xf]
        %v483 = vld [vmem:[#allocation4 + $0x34] sm:$0xf]
        %v484 = vld [vmem:[#allocation4 + $0x38] sm:$0xf]
        %v485 = vld [vmem:[#allocation4 + $0x3c] sm:$0xf]
        %v486 = vld [vmem:[#allocation5 + $0x1] sm:$0x1]
        %v487 = vperm.slane %v486, 0
        %v504 = vunpack.c.l.b16 %v470
        %v505 = vunpack.c.l.b16 %v471
        %v506 = vunpack.c.l.b16 %v472
        %v507 = vunpack.c.l.b16 %v473
        %v508 = vunpack.c.l.b16 %v474
        %v509 = vunpack.c.l.b16 %v475
        %v510 = vunpack.c.l.b16 %v476
        %v511 = vunpack.c.l.b16 %v477
        %v512 = vunpack.c.l.b16 %v478
        %v513 = vunpack.c.l.b16 %v479
        %v514 = vunpack.c.l.b16 %v480
        %v515 = vunpack.c.l.b16 %v481
        %v516 = vunpack.c.l.b16 %v482
        %v517 = vunpack.c.l.b16 %v483
        %v518 = vunpack.c.l.b16 %v484
        %v519 = vunpack.c.l.b16 %v485
        %v520 = vpack.c.b16 %v505, %v504
        %v521 = vpack.c.b16 %v507, %v506
        %v522 = vpack.c.b16 %v509, %v508
        %v523 = vpack.c.b16 %v511, %v510
        %v524 = vpack.c.b16 %v513, %v512
        %v525 = vpack.c.b16 %v515, %v514
        %v526 = vpack.c.b16 %v517, %v516
        %v527 = vpack.c.b16 %v519, %v518
        %536 = vmatpush.bf16.msra.mxu0 %v527
        %537 = vmatpush.bf16.msra.mxu0 %v526
        %538 = vmatpush.bf16.msra.mxu0 %v525
        %539 = vmatpush.bf16.msra.mxu0 %v524
        %540 = vmatpush.bf16.msra.mxu0 %v523
        %541 = vmatpush.bf16.msra.mxu0 %v522
        %542 = vmatpush.bf16.msra.mxu0 %v521
        %543 = vmatpush.bf16.msra.mxu0 %v520
        %544 = vmatmul.bf16.gmra.mxu0 %v363
        %v545 = vpop.f32.mrf.mxu0
        %v546 = vadd.f32 %v487, %v545
        %v547 = vpop.f32.mrf.mxu0
        %v548 = vadd.f32 %v487, %v547
        %549 = vmatmul.bf16.gmra.mxu0 %v364
        %v550 = vpop.f32.mrf.mxu0
        %v551 = vadd.f32 %v487, %v550
        %v552 = vpop.f32.mrf.mxu0
        %v553 = vadd.f32 %v487, %v552
        %554 = vmatmul.bf16.gmra.mxu0 %v365
        %v555 = vpop.f32.mrf.mxu0
        %v556 = vadd.f32 %v487, %v555
        %v557 = vpop.f32.mrf.mxu0
        %v558 = vadd.f32 %v487, %v557
        %559 = vmatmul.bf16.gmra.mxu0 %v366
        %v560 = vpop.f32.mrf.mxu0
        %v561 = vadd.f32 %v487, %v560
        %v562 = vpop.f32.mrf.mxu0
        %v563 = vadd.f32 %v487, %v562
        %564 = vdwg.mxu0
        %v565 = vpack.c.bf16 %v546, %v546
        %v566 = vpack.c.bf16 %v548, %v548
        %v567 = vpack.c.bf16 %v551, %v551
        %v568 = vpack.c.bf16 %v553, %v553
        %v569 = vpack.c.bf16 %v556, %v556
        %v570 = vpack.c.bf16 %v558, %v558
        %v571 = vpack.c.bf16 %v561, %v561
        %v572 = vpack.c.bf16 %v563, %v563
        %v573 = vlaneseq
        %v574 = vand.u32 %v573, 127
        %v575 = vlaneseq
        %v576 = vshrl.u32 %v575, 7
        %v577 = vmul.u32 %v576, 8
        %vm578 = vcmp.ge.s32.totalorder %v574, %v577
        %v579 = vadd.s32 %v576, 1
        %v580 = vmul.u32 %v579, 8
        %vm581 = vcmp.lt.s32.totalorder %v574, %v580
        %vm582 = vmand %vm578, %vm581
        %v583 = vsel %vm582, 1, 0
        %v584 = vcvt.s32.f32 %v583
        %v585 = vpack.c.bf16 %v584, %v584
        %v586 = vld [vmem:[%s189] sm:$0xff]
        %v587 = vpack.c.bf16 %v586, %v586
        %v589 = vrot.slane %v587, 3
        %vm590 = vcmask 1040384
        %v593 = vsel %vm590, %v587, %v589
        %vm595 = vcmask 1041409
        %v596 = vsel %vm595, %v587, %v589
        %v598 = vrot.slane %v596, 1
        %vm599 = vcmask 1042434
        %v600 = vsel %vm599, %v587, %v589
        %v602 = vrot.slane %v600, 2
        %vm603 = vcmask 1043459
        %v604 = vsel %vm603, %v587, %v589
        %v606 = vrot.slane %v604, 3
        %v607 = vunpack.i.l.s16 %v593
        %v608 = vunpack.i.h.s16 %v593
        %v609 = vunpack.i.l.s16 %v598
        %v610 = vunpack.i.h.s16 %v598
        %v611 = vunpack.i.l.s16 %v602
        %v612 = vunpack.i.h.s16 %v602
        %v613 = vunpack.i.l.s16 %v606
        %v614 = vunpack.i.h.s16 %v606
        %v615 = vpack.i.b16 %v607, %v607
        %v616 = vpack.i.b16 %v608, %v608
        %v617 = vpack.i.b16 %v609, %v609
        %v618 = vpack.i.b16 %v610, %v610
        %v619 = vpack.i.b16 %v611, %v611
        %v620 = vpack.i.b16 %v612, %v612
        %v621 = vpack.i.b16 %v613, %v613
        %v622 = vpack.i.b16 %v614, %v614
        %v623 = vperm.slane %v615, 0
        %v624 = vperm.slane %v616, 0
        %v625 = vperm.slane %v617, 0
        %v626 = vperm.slane %v618, 0
        %v627 = vperm.slane %v619, 0
        %v628 = vperm.slane %v620, 0
        %v629 = vperm.slane %v621, 0
        %v630 = vperm.slane %v622, 0
        %v632 = vpack.i.b16 %v623, %v623
        %v634 = vperm.slane %v632, 0
        %v636 = vpack.i.b16 %v624, %v624
        %v638 = vperm.slane %v636, 0
        %v640 = vpack.i.b16 %v625, %v625
        %v642 = vperm.slane %v640, 0
        %v644 = vpack.i.b16 %v626, %v626
        %v646 = vperm.slane %v644, 0
        %v648 = vpack.i.b16 %v627, %v627
        %v650 = vperm.slane %v648, 0
        %v652 = vpack.i.b16 %v628, %v628
        %v654 = vperm.slane %v652, 0
        %v656 = vpack.i.b16 %v629, %v629
        %v658 = vperm.slane %v656, 0
        %v660 = vpack.i.b16 %v630, %v630
        %v662 = vperm.slane %v660, 0
        %v663 = vunpack.c.l.bf16 %v634
        %v664 = vunpack.c.l.bf16 %v638
        %v665 = vunpack.c.l.bf16 %v642
        %v666 = vunpack.c.l.bf16 %v646
        %v667 = vunpack.c.l.bf16 %v650
        %v668 = vunpack.c.l.bf16 %v654
        %v669 = vunpack.c.l.bf16 %v658
        %v670 = vunpack.c.l.bf16 %v662
        %v671 = vunpack.c.l.bf16 %v585
        %v672 = vmul.f32 %v663, %v671
        %v673 = vmul.f32 %v664, %v671
        %v674 = vmul.f32 %v665, %v671
        %v675 = vmul.f32 %v666, %v671
        %v676 = vmul.f32 %v667, %v671
        %v677 = vmul.f32 %v668, %v671
        %v678 = vmul.f32 %v669, %v671
        %v679 = vmul.f32 %v670, %v671
        %v680 = vpack.c.bf16 %v672, %v672
        %v681 = vpack.c.bf16 %v673, %v673
        %v682 = vpack.c.bf16 %v674, %v674
        %v683 = vpack.c.bf16 %v675, %v675
        %v684 = vpack.c.bf16 %v676, %v676
        %v685 = vpack.c.bf16 %v677, %v677
        %v686 = vpack.c.bf16 %v678, %v678
        %v687 = vpack.c.bf16 %v679, %v679
        %688 = vmatpush.bf16.xpose.msra.mxu0 0
        %689 = vmatpush.bf16.xpose.msra.mxu0 0
        %690 = vmatpush.bf16.xpose.msra.mxu0 0
        %691 = vmatpush.bf16.xpose.msra.mxu0 0
        %692 = vmatpush.bf16.xpose.msra.mxu0 0
        %693 = vmatpush.bf16.xpose.msra.mxu0 0
        %694 = vmatpush.bf16.xpose.msra.mxu0 0
        %695 = vmatpush.bf16.xpose.msra.mxu0 %v462
        %696 = vmatmul.bf16.gmra.mxu0 %v680
        %v697 = vpop.f32.mrf.mxu0
        %v698 = vadd.f32 0.0, %v697
        %v699 = vpop.f32.mrf.mxu0
        %700 = vdwg.mxu0
        %701 = vmatpush.bf16.xpose.msra.mxu0 0
        %702 = vmatpush.bf16.xpose.msra.mxu0 0
        %703 = vmatpush.bf16.xpose.msra.mxu0 0
        %704 = vmatpush.bf16.xpose.msra.mxu0 0
        %705 = vmatpush.bf16.xpose.msra.mxu0 0
        %706 = vmatpush.bf16.xpose.msra.mxu0 0
        %707 = vmatpush.bf16.xpose.msra.mxu0 0
        %708 = vmatpush.bf16.xpose.msra.mxu0 %v463
        %709 = vmatmul.bf16.gmra.mxu0 %v681
        %v710 = vpop.f32.mrf.mxu0
        %v711 = vadd.f32 0.0, %v710
        %v712 = vpop.f32.mrf.mxu0
        %713 = vdwg.mxu0
        %714 = vmatpush.bf16.xpose.msra.mxu0 0
        %715 = vmatpush.bf16.xpose.msra.mxu0 0
        %716 = vmatpush.bf16.xpose.msra.mxu0 0
        %717 = vmatpush.bf16.xpose.msra.mxu0 0
        %718 = vmatpush.bf16.xpose.msra.mxu0 0
        %719 = vmatpush.bf16.xpose.msra.mxu0 0
        %720 = vmatpush.bf16.xpose.msra.mxu0 0
        %721 = vmatpush.bf16.xpose.msra.mxu0 %v464
        %722 = vmatmul.bf16.gmra.mxu0 %v682
        %v723 = vpop.f32.mrf.mxu0
        %v724 = vadd.f32 0.0, %v723
        %v725 = vpop.f32.mrf.mxu0
        %726 = vdwg.mxu0
        %727 = vmatpush.bf16.xpose.msra.mxu0 0
        %728 = vmatpush.bf16.xpose.msra.mxu0 0
        %729 = vmatpush.bf16.xpose.msra.mxu0 0
        %730 = vmatpush.bf16.xpose.msra.mxu0 0
        %731 = vmatpush.bf16.xpose.msra.mxu0 0
        %732 = vmatpush.bf16.xpose.msra.mxu0 0
        %733 = vmatpush.bf16.xpose.msra.mxu0 0
        %734 = vmatpush.bf16.xpose.msra.mxu0 %v465
        %735 = vmatmul.bf16.gmra.mxu0 %v683
        %v736 = vpop.f32.mrf.mxu0
        %v737 = vadd.f32 0.0, %v736
        %v738 = vpop.f32.mrf.mxu0
        %739 = vdwg.mxu0
        %740 = vmatpush.bf16.xpose.msra.mxu0 0
        %741 = vmatpush.bf16.xpose.msra.mxu0 0
        %742 = vmatpush.bf16.xpose.msra.mxu0 0
        %743 = vmatpush.bf16.xpose.msra.mxu0 0
        %744 = vmatpush.bf16.xpose.msra.mxu0 0
        %745 = vmatpush.bf16.xpose.msra.mxu0 0
        %746 = vmatpush.bf16.xpose.msra.mxu0 0
        %747 = vmatpush.bf16.xpose.msra.mxu0 %v466
        %748 = vmatmul.bf16.gmra.mxu0 %v684
        %v749 = vpop.f32.mrf.mxu0
        %v750 = vadd.f32 0.0, %v749
        %v751 = vpop.f32.mrf.mxu0
        %752 = vdwg.mxu0
        %753 = vmatpush.bf16.xpose.msra.mxu0 0
        %754 = vmatpush.bf16.xpose.msra.mxu0 0
        %755 = vmatpush.bf16.xpose.msra.mxu0 0
        %756 = vmatpush.bf16.xpose.msra.mxu0 0
        %757 = vmatpush.bf16.xpose.msra.mxu0 0
        %758 = vmatpush.bf16.xpose.msra.mxu0 0
        %759 = vmatpush.bf16.xpose.msra.mxu0 0
        %760 = vmatpush.bf16.xpose.msra.mxu0 %v467
        %761 = vmatmul.bf16.gmra.mxu0 %v685
        %v762 = vpop.f32.mrf.mxu0
        %v763 = vadd.f32 0.0, %v762
        %v764 = vpop.f32.mrf.mxu0
        %765 = vdwg.mxu0
        %766 = vmatpush.bf16.xpose.msra.mxu0 0
        %767 = vmatpush.bf16.xpose.msra.mxu0 0
        %768 = vmatpush.bf16.xpose.msra.mxu0 0
        %769 = vmatpush.bf16.xpose.msra.mxu0 0
        %770 = vmatpush.bf16.xpose.msra.mxu0 0
        %771 = vmatpush.bf16.xpose.msra.mxu0 0
        %772 = vmatpush.bf16.xpose.msra.mxu0 0
        %773 = vmatpush.bf16.xpose.msra.mxu0 %v468
        %774 = vmatmul.bf16.gmra.mxu0 %v686
        %v775 = vpop.f32.mrf.mxu0
        %v776 = vadd.f32 0.0, %v775
        %v777 = vpop.f32.mrf.mxu0
        %778 = vdwg.mxu0
        %779 = vmatpush.bf16.xpose.msra.mxu0 0
        %780 = vmatpush.bf16.xpose.msra.mxu0 0
        %781 = vmatpush.bf16.xpose.msra.mxu0 0
        %782 = vmatpush.bf16.xpose.msra.mxu0 0
        %783 = vmatpush.bf16.xpose.msra.mxu0 0
        %784 = vmatpush.bf16.xpose.msra.mxu0 0
        %785 = vmatpush.bf16.xpose.msra.mxu0 0
        %786 = vmatpush.bf16.xpose.msra.mxu0 %v469
        %787 = vmatmul.bf16.gmra.mxu0 %v687
        %v788 = vpop.f32.mrf.mxu0
        %v789 = vadd.f32 0.0, %v788
        %v790 = vpop.f32.mrf.mxu0
        %791 = vdwg.mxu0
        %v792 = vld [vmem:[%s195] sm:$0xff]
        %vm793 = vcmp.gt.f32.partialorder %v792, 0.0
        %v794 = vsel %vm793, 1, 0
        %v795 = vrot.slane %v794, 1
        %v796 = vrot.slane %v794, 2
        %v797 = vrot.slane %v794, 3
        %v798 = vrot.slane %v794, 4
        %v799 = vrot.slane %v794, 5
        %v800 = vrot.slane %v794, 6
        %v801 = vrot.slane %v794, 7
        %vm802 = vcmp.ne.s32.totalorder %v795, 0
        %vm803 = vcmp.ne.s32.totalorder %v796, 0
        %vm804 = vcmp.ne.s32.totalorder %v797, 0
        %vm805 = vcmp.ne.s32.totalorder %v798, 0
        %vm806 = vcmp.ne.s32.totalorder %v799, 0
        %vm807 = vcmp.ne.s32.totalorder %v800, 0
        %vm808 = vcmp.ne.s32.totalorder %v801, 0
        %v809 = vsel %vm802, 1, 0
        %v810 = vsel %vm803, 1, 0
        %v811 = vsel %vm804, 1, 0
        %v812 = vsel %vm805, 1, 0
        %v813 = vsel %vm806, 1, 0
        %v814 = vsel %vm807, 1, 0
        %v815 = vsel %vm808, 1, 0
        %v816 = vperm.slane %v794, 0
        %v817 = vperm.slane %v809, 0
        %v818 = vperm.slane %v810, 0
        %v819 = vperm.slane %v811, 0
        %v820 = vperm.slane %v812, 0
        %v821 = vperm.slane %v813, 0
        %v822 = vperm.slane %v814, 0
        %v823 = vperm.slane %v815, 0
        %vm824 = vcmp.eq.s32.totalorder %v816, 1
        %vm825 = vcmp.eq.s32.totalorder %v817, 1
        %vm826 = vcmp.eq.s32.totalorder %v818, 1
        %vm827 = vcmp.eq.s32.totalorder %v819, 1
        %vm828 = vcmp.eq.s32.totalorder %v820, 1
        %vm829 = vcmp.eq.s32.totalorder %v821, 1
        %vm830 = vcmp.eq.s32.totalorder %v822, 1
        %vm831 = vcmp.eq.s32.totalorder %v823, 1
        %v832 = vsel %vm824, %v698, -1e+30
        %v833 = vsel %vm825, %v711, -1e+30
        %v834 = vsel %vm826, %v724, -1e+30
        %v835 = vsel %vm827, %v737, -1e+30
        %v836 = vsel %vm828, %v750, -1e+30
        %v837 = vsel %vm829, %v763, -1e+30
        %v838 = vsel %vm830, %v776, -1e+30
        %v839 = vsel %vm831, %v789, -1e+30
        %vm840 = vcmask 60416
        %v841 = vsel %vm840, %v832, -inf
        %842 = vmax.xlane.f32.xlu0 %v841
        %v843 = vpop.xlane.xlu0 %842
        %v844 = vsel %vm840, %v833, -inf
        %845 = vmax.xlane.f32.xlu0 %v844
        %v846 = vpop.xlane.xlu0 %845
        %v847 = vsel %vm840, %v834, -inf
        %848 = vmax.xlane.f32.xlu0 %v847
        %v849 = vpop.xlane.xlu0 %848
        %v850 = vsel %vm840, %v835, -inf
        %851 = vmax.xlane.f32.xlu0 %v850
        %v852 = vpop.xlane.xlu0 %851
        %v853 = vsel %vm840, %v836, -inf
        %854 = vmax.xlane.f32.xlu0 %v853
        %v855 = vpop.xlane.xlu0 %854
        %v856 = vsel %vm840, %v837, -inf
        %857 = vmax.xlane.f32.xlu0 %v856
        %v858 = vpop.xlane.xlu0 %857
        %v859 = vsel %vm840, %v838, -inf
        %860 = vmax.xlane.f32.xlu0 %v859
        %v861 = vpop.xlane.xlu0 %860
        %v862 = vsel %vm840, %v839, -inf
        %863 = vmax.xlane.f32.xlu0 %v862
        %v864 = vpop.xlane.xlu0 %863
        %v865 = vsub.f32 %v832, %v843
        %v866 = vsub.f32 %v833, %v846
        %v867 = vsub.f32 %v834, %v849
        %v868 = vsub.f32 %v835, %v852
        %v869 = vsub.f32 %v836, %v855
        %v870 = vsub.f32 %v837, %v858
        %v871 = vsub.f32 %v838, %v861
        %v872 = vsub.f32 %v839, %v864
        %v873 = vmul.f32 %v865, 1.442695
        %v874 = vpow.pop %v873
        %v875 = vmul.f32 %v866, 1.442695
        %v876 = vpow.pop %v875
        %v877 = vmul.f32 %v867, 1.442695
        %v878 = vpow.pop %v877
        %v879 = vmul.f32 %v868, 1.442695
        %v880 = vpow.pop %v879
        %v881 = vmul.f32 %v869, 1.442695
        %v882 = vpow.pop %v881
        %v883 = vmul.f32 %v870, 1.442695
        %v884 = vpow.pop %v883
        %v885 = vmul.f32 %v871, 1.442695
        %v886 = vpow.pop %v885
        %v887 = vmul.f32 %v872, 1.442695
        %v888 = vpow.pop %v887
        %v889 = vsel %vm824, %v874, 0.0
        %v890 = vsel %vm825, %v876, 0.0
        %v891 = vsel %vm826, %v878, 0.0
        %v892 = vsel %vm827, %v880, 0.0
        %v893 = vsel %vm828, %v882, 0.0
        %v894 = vsel %vm829, %v884, 0.0
        %v895 = vsel %vm830, %v886, 0.0
        %v896 = vsel %vm831, %v888, 0.0
        %v897 = vsel %vm840, %v889, 0.0
        %898 = vadd.xlane.f32.xlu0 %v897
        %v899 = vpop.xlane.xlu0 %898
        %v900 = vsel %vm840, %v890, 0.0
        %901 = vadd.xlane.f32.xlu0 %v900
        %v902 = vpop.xlane.xlu0 %901
        %v903 = vsel %vm840, %v891, 0.0
        %904 = vadd.xlane.f32.xlu0 %v903
        %v905 = vpop.xlane.xlu0 %904
        %v906 = vsel %vm840, %v892, 0.0
        %907 = vadd.xlane.f32.xlu0 %v906
        %v908 = vpop.xlane.xlu0 %907
        %v909 = vsel %vm840, %v893, 0.0
        %910 = vadd.xlane.f32.xlu0 %v909
        %v911 = vpop.xlane.xlu0 %910
        %v912 = vsel %vm840, %v894, 0.0
        %913 = vadd.xlane.f32.xlu0 %v912
        %v914 = vpop.xlane.xlu0 %913
        %v915 = vsel %vm840, %v895, 0.0
        %916 = vadd.xlane.f32.xlu0 %v915
        %v917 = vpop.xlane.xlu0 %916
        %v918 = vsel %vm840, %v896, 0.0
        %919 = vadd.xlane.f32.xlu0 %v918
        %v920 = vpop.xlane.xlu0 %919
        %vm921 = vcmp.gt.f32.partialorder %v899, 0.0
        %vm922 = vcmp.gt.f32.partialorder %v902, 0.0
        %vm923 = vcmp.gt.f32.partialorder %v905, 0.0
        %vm924 = vcmp.gt.f32.partialorder %v908, 0.0
        %vm925 = vcmp.gt.f32.partialorder %v911, 0.0
        %vm926 = vcmp.gt.f32.partialorder %v914, 0.0
        %vm927 = vcmp.gt.f32.partialorder %v917, 0.0
        %vm928 = vcmp.gt.f32.partialorder %v920, 0.0
        %v929 = vsel %vm921, %v899, 1.0
        %v930 = vsel %vm922, %v902, 1.0
        %v931 = vsel %vm923, %v905, 1.0
        %v932 = vsel %vm924, %v908, 1.0
        %v933 = vsel %vm925, %v911, 1.0
        %v934 = vsel %vm926, %v914, 1.0
        %v935 = vsel %vm927, %v917, 1.0
        %v936 = vsel %vm928, %v920, 1.0
        %v937 = vrcp.pop %v929
        %v938 = vrcp.pop %v930
        %v939 = vrcp.pop %v931
        %v940 = vrcp.pop %v932
        %v941 = vrcp.pop %v933
        %v942 = vrcp.pop %v934
        %v943 = vrcp.pop %v935
        %v944 = vrcp.pop %v936
        %v945 = vmul.f32 %v889, %v937
        %v946 = vmul.f32 %v890, %v938
        %v947 = vmul.f32 %v891, %v939
        %v948 = vmul.f32 %v892, %v940
        %v949 = vmul.f32 %v893, %v941
        %v950 = vmul.f32 %v894, %v942
        %v951 = vmul.f32 %v895, %v943
        %v952 = vmul.f32 %v896, %v944
        %v953 = vpack.c.bf16 %v945, %v945
        %v954 = vpack.c.bf16 %v946, %v946
        %v955 = vpack.c.bf16 %v947, %v947
        %v956 = vpack.c.bf16 %v948, %v948
        %v957 = vpack.c.bf16 %v949, %v949
        %v958 = vpack.c.bf16 %v950, %v950
        %v959 = vpack.c.bf16 %v951, %v951
        %v960 = vpack.c.bf16 %v952, %v952
        %vm961 = vcmask 64512
        %v963 = vsel %vm961, %v953, 0
        %vm965 = vcmask 1043456
        %v967 = vsel %vm965, %v565, 0
        %969 = vmatpush.bf16.msra.mxu0 0
        %970 = vmatpush.bf16.msra.mxu0 0
        %971 = vmatpush.bf16.msra.mxu0 0
        %972 = vmatpush.bf16.msra.mxu0 0
        %973 = vmatpush.bf16.msra.mxu0 0
        %974 = vmatpush.bf16.msra.mxu0 0
        %975 = vmatpush.bf16.msra.mxu0 0
        %976 = vmatpush.bf16.msra.mxu0 %v967
        %977 = vmatmul.bf16.gmra.mxu0 %v963
        %v978 = vpop.f32.mrf.mxu0
        %v979 = vadd.f32 0.0, %v978
        %v980 = vpop.f32.mrf.mxu0
        %981 = vdwg.mxu0
        %v983 = vsel %vm961, %v954, 0
        %v986 = vsel %vm965, %v566, 0
        %988 = vmatpush.bf16.msra.mxu0 0
        %989 = vmatpush.bf16.msra.mxu0 0
        %990 = vmatpush.bf16.msra.mxu0 0
        %991 = vmatpush.bf16.msra.mxu0 0
        %992 = vmatpush.bf16.msra.mxu0 0
        %993 = vmatpush.bf16.msra.mxu0 0
        %994 = vmatpush.bf16.msra.mxu0 0
        %995 = vmatpush.bf16.msra.mxu0 %v986
        %996 = vmatmul.bf16.gmra.mxu0 %v983
        %v997 = vpop.f32.mrf.mxu0
        %v998 = vadd.f32 0.0, %v997
        %v999 = vpop.f32.mrf.mxu0
        %1000 = vdwg.mxu0
        %v1002 = vsel %vm961, %v955, 0
        %v1005 = vsel %vm965, %v567, 0
        %1007 = vmatpush.bf16.msra.mxu0 0
        %1008 = vmatpush.bf16.msra.mxu0 0
        %1009 = vmatpush.bf16.msra.mxu0 0
        %1010 = vmatpush.bf16.msra.mxu0 0
        %1011 = vmatpush.bf16.msra.mxu0 0
        %1012 = vmatpush.bf16.msra.mxu0 0
        %1013 = vmatpush.bf16.msra.mxu0 0
        %1014 = vmatpush.bf16.msra.mxu0 %v1005
        %1015 = vmatmul.bf16.gmra.mxu0 %v1002
        %v1016 = vpop.f32.mrf.mxu0
        %v1017 = vadd.f32 0.0, %v1016
        %v1018 = vpop.f32.mrf.mxu0
        %1019 = vdwg.mxu0
        %v1021 = vsel %vm961, %v956, 0
        %v1024 = vsel %vm965, %v568, 0
        %1026 = vmatpush.bf16.msra.mxu0 0
        %1027 = vmatpush.bf16.msra.mxu0 0
        %1028 = vmatpush.bf16.msra.mxu0 0
        %1029 = vmatpush.bf16.msra.mxu0 0
        %1030 = vmatpush.bf16.msra.mxu0 0
        %1031 = vmatpush.bf16.msra.mxu0 0
        %1032 = vmatpush.bf16.msra.mxu0 0
        %1033 = vmatpush.bf16.msra.mxu0 %v1024
        %1034 = vmatmul.bf16.gmra.mxu0 %v1021
        %v1035 = vpop.f32.mrf.mxu0
        %v1036 = vadd.f32 0.0, %v1035
        %v1037 = vpop.f32.mrf.mxu0
        %1038 = vdwg.mxu0
        %v1040 = vsel %vm961, %v957, 0
        %v1043 = vsel %vm965, %v569, 0
        %1045 = vmatpush.bf16.msra.mxu0 0
        %1046 = vmatpush.bf16.msra.mxu0 0
        %1047 = vmatpush.bf16.msra.mxu0 0
        %1048 = vmatpush.bf16.msra.mxu0 0
        %1049 = vmatpush.bf16.msra.mxu0 0
        %1050 = vmatpush.bf16.msra.mxu0 0
        %1051 = vmatpush.bf16.msra.mxu0 0
        %1052 = vmatpush.bf16.msra.mxu0 %v1043
        %1053 = vmatmul.bf16.gmra.mxu0 %v1040
        %v1054 = vpop.f32.mrf.mxu0
        %v1055 = vadd.f32 0.0, %v1054
        %v1056 = vpop.f32.mrf.mxu0
        %1057 = vdwg.mxu0
        %v1059 = vsel %vm961, %v958, 0
        %v1062 = vsel %vm965, %v570, 0
        %1064 = vmatpush.bf16.msra.mxu0 0
        %1065 = vmatpush.bf16.msra.mxu0 0
        %1066 = vmatpush.bf16.msra.mxu0 0
        %1067 = vmatpush.bf16.msra.mxu0 0
        %1068 = vmatpush.bf16.msra.mxu0 0
        %1069 = vmatpush.bf16.msra.mxu0 0
        %1070 = vmatpush.bf16.msra.mxu0 0
        %1071 = vmatpush.bf16.msra.mxu0 %v1062
        %1072 = vmatmul.bf16.gmra.mxu0 %v1059
        %v1073 = vpop.f32.mrf.mxu0
        %v1074 = vadd.f32 0.0, %v1073
        %v1075 = vpop.f32.mrf.mxu0
        %1076 = vdwg.mxu0
        %v1078 = vsel %vm961, %v959, 0
        %v1081 = vsel %vm965, %v571, 0
        %1083 = vmatpush.bf16.msra.mxu0 0
        %1084 = vmatpush.bf16.msra.mxu0 0
        %1085 = vmatpush.bf16.msra.mxu0 0
        %1086 = vmatpush.bf16.msra.mxu0 0
        %1087 = vmatpush.bf16.msra.mxu0 0
        %1088 = vmatpush.bf16.msra.mxu0 0
        %1089 = vmatpush.bf16.msra.mxu0 0
        %1090 = vmatpush.bf16.msra.mxu0 %v1081
        %1091 = vmatmul.bf16.gmra.mxu0 %v1078
        %v1092 = vpop.f32.mrf.mxu0
        %v1093 = vadd.f32 0.0, %v1092
        %v1094 = vpop.f32.mrf.mxu0
        %1095 = vdwg.mxu0
        %v1097 = vsel %vm961, %v960, 0
        %v1100 = vsel %vm965, %v572, 0
        %1102 = vmatpush.bf16.msra.mxu0 0
        %1103 = vmatpush.bf16.msra.mxu0 0
        %1104 = vmatpush.bf16.msra.mxu0 0
        %1105 = vmatpush.bf16.msra.mxu0 0
        %1106 = vmatpush.bf16.msra.mxu0 0
        %1107 = vmatpush.bf16.msra.mxu0 0
        %1108 = vmatpush.bf16.msra.mxu0 0
        %1109 = vmatpush.bf16.msra.mxu0 %v1100
        %1110 = vmatmul.bf16.gmra.mxu0 %v1097
        %v1111 = vpop.f32.mrf.mxu0
        %v1112 = vadd.f32 0.0, %v1111
        %v1113 = vpop.f32.mrf.mxu0
        %1114 = vdwg.mxu0
        %v1115 = vmul.f32 %v979, %v584
        %v1116 = vmul.f32 %v998, %v584
        %v1117 = vmul.f32 %v1017, %v584
        %v1118 = vmul.f32 %v1036, %v584
        %v1119 = vmul.f32 %v1055, %v584
        %v1120 = vmul.f32 %v1074, %v584
        %v1121 = vmul.f32 %v1093, %v584
        %v1122 = vmul.f32 %v1112, %v584
        %v1123 = vsel %vm965, %v1115, 0.0
        %v1124 = vrot.slane %v1123, 4
        %v1125 = vadd.f32 %v1123, %v1124
        %v1126 = vrot.slane %v1125, 2
        %v1127 = vadd.f32 %v1125, %v1126
        %v1128 = vrot.slane %v1127, 1
        %v1129 = vadd.f32 %v1127, %v1128
        %v1130 = vsel %vm965, %v1116, 0.0
        %v1131 = vrot.slane %v1130, 4
        %v1132 = vadd.f32 %v1130, %v1131
        %v1133 = vrot.slane %v1132, 2
        %v1134 = vadd.f32 %v1132, %v1133
        %v1135 = vrot.slane %v1134, 1
        %v1136 = vadd.f32 %v1134, %v1135
        %v1137 = vsel %vm965, %v1117, 0.0
        %v1138 = vrot.slane %v1137, 4
        %v1139 = vadd.f32 %v1137, %v1138
        %v1140 = vrot.slane %v1139, 2
        %v1141 = vadd.f32 %v1139, %v1140
        %v1142 = vrot.slane %v1141, 1
        %v1143 = vadd.f32 %v1141, %v1142
        %v1144 = vsel %vm965, %v1118, 0.0
        %v1145 = vrot.slane %v1144, 4
        %v1146 = vadd.f32 %v1144, %v1145
        %v1147 = vrot.slane %v1146, 2
        %v1148 = vadd.f32 %v1146, %v1147
        %v1149 = vrot.slane %v1148, 1
        %v1150 = vadd.f32 %v1148, %v1149
        %v1151 = vsel %vm965, %v1119, 0.0
        %v1152 = vrot.slane %v1151, 4
        %v1153 = vadd.f32 %v1151, %v1152
        %v1154 = vrot.slane %v1153, 2
        %v1155 = vadd.f32 %v1153, %v1154
        %v1156 = vrot.slane %v1155, 1
        %v1157 = vadd.f32 %v1155, %v1156
        %v1158 = vsel %vm965, %v1120, 0.0
        %v1159 = vrot.slane %v1158, 4
        %v1160 = vadd.f32 %v1158, %v1159
        %v1161 = vrot.slane %v1160, 2
        %v1162 = vadd.f32 %v1160, %v1161
        %v1163 = vrot.slane %v1162, 1
        %v1164 = vadd.f32 %v1162, %v1163
        %v1165 = vsel %vm965, %v1121, 0.0
        %v1166 = vrot.slane %v1165, 4
        %v1167 = vadd.f32 %v1165, %v1166
        %v1168 = vrot.slane %v1167, 2
        %v1169 = vadd.f32 %v1167, %v1168
        %v1170 = vrot.slane %v1169, 1
        %v1171 = vadd.f32 %v1169, %v1170
        %v1172 = vsel %vm965, %v1122, 0.0
        %v1173 = vrot.slane %v1172, 4
        %v1174 = vadd.f32 %v1172, %v1173
        %v1175 = vrot.slane %v1174, 2
        %v1176 = vadd.f32 %v1174, %v1175
        %v1177 = vrot.slane %v1176, 1
        %v1178 = vadd.f32 %v1176, %v1177
        %v1187 = vsel %vm595, %v1136, %v1129
        %v1188 = vsel %vm599, %v1143, %v1187
        %v1189 = vsel %vm603, %v1150, %v1188
        %vm1190 = vcmask 1044484
        %v1191 = vsel %vm1190, %v1157, %v1189
        %vm1192 = vcmask 1045509
        %v1193 = vsel %vm1192, %v1164, %v1191
        %vm1194 = vcmask 1046534
        %v1195 = vsel %vm1194, %v1171, %v1193
        %vm1196 = vcmask 1047559
        %v1197 = vsel %vm1196, %v1178, %v1195
        %1199 = vst [vmem:[%s184] sm:$0xff] %v1197
        %s1200 = sand.u32 %s107, 1
        %s1201 = scalar_lea.sflag [#allocation11], %s1200
        %s1202 = sand.u32 %s107, 1
        %s1203 = smul.addr %s1202, 8
        %s1204 = scalar_lea.vmem [#allocation10], %s1203
        // Predicated region
        $region82: #{tpu_custom_call.1} parent=27 // pred_check
          %p1205 = pneg %p117
        $region83: #{tpu_custom_call.1} parent=27 // pred_check_branch
          %1207 = sbr.rel (%p1205) target = $region85
        $region84: #{tpu_custom_call.1} parent=27 // pred_region
          %s1208 = sadd.s32 %s33, %s34
          %1210 = vsyncadd %s1201, 0
          %s1211 = smul.addr %s1208, 8
          %s1212 = scalar_lea.hbm %s7, %s1211
          %s1214 = sshll.u32 %s1204, 4
          %s1215 = int_to_ptr.vmem [resolvable:$true] %s1214
          %s1216 = sshll.u32 %s1212, 4
          %s1217 = int_to_ptr.hbm [resolvable:$true] %s1216
          %1219 = dma.vmem_to_hbm [thread:$0]  %s1215, 128, %s1217, %s1201
        $region85: #{tpu_custom_call.1} parent=27 // pred_fallthru
          _
      $region28: #{tpu_custom_call.1} parent=5 // pred_fallthru
        _
      %p1220 = scmp.le.s32.totalorder 2, %s24
      // Predicated region
      $region86: #{tpu_custom_call.1} parent=5 // pred_check
        %p1221 = pneg %p1220
      $region87: #{tpu_custom_call.1} parent=5 // pred_check_branch
        %1223 = sbr.rel (%p1221) target = $region89
      $region88: #{tpu_custom_call.1} parent=5 // pred_region
        %s1224 = ssub.s32 %s24, 2
        // Predicated region
        $region90: #{tpu_custom_call.1} parent=88 // pred_check
          %p1225 = pneg %p123
        $region91: #{tpu_custom_call.1} parent=88 // pred_check_branch
          %1227 = sbr.rel (%p1225) target = $region93
        $region92: #{tpu_custom_call.1} parent=88 // pred_region
          %s1228 = sand.u32 %s108, 1
          %s1229 = scalar_lea.sflag [#allocation11], %s1228
          %s1230 = sand.u32 %s108, 1
          %s1231 = smul.addr %s1230, 8
          %s1232 = scalar_lea.vmem [#allocation10], %s1231
          %1234 = dma.done %s1229, 128
        $region93: #{tpu_custom_call.1} parent=88 // pred_fallthru
          _
      $region89: #{tpu_custom_call.1} parent=5 // pred_fallthru
        _
    $region6: #{tpu_custom_call.1} parent=1 // loop_footer
      %s28 = sadd.s32 1, %s24
    $region7: #{tpu_custom_call.1} parent=1 // loop_footer_branch
      %23 = sbr.rel target = $region3
    $region8: #{tpu_custom_call.1} parent=1 // loop_exit
      _
    %1235 = vsyncpa [#allocation11], 1
    %s1236 = scalar_lea.sflag [#allocation11], 1
    %1237 = vsyncpa %s1236, 1
  %1238 = vsyncmov [#allocation7]
  %s1239 = vpop.sfrf %1238
  %p1240 = scmp.eq.s32.totalorder %s1239, 0
  %p1241 = pneg %p1240
  %1243 = shalt.err (%p1241)
  %s1244 = scalar_lea.sflag [#allocation7], 1
  %1245 = vsyncmov %s1244
  %s1246 = vpop.sfrf %1245
  %p1247 = scmp.eq.s32.totalorder %s1246, 0
  %p1248 = pneg %p1247
  %1250 = shalt.err (%p1248)
  %s1251 = scalar_lea.sflag [#allocation7], 2
  %1252 = vsyncmov %s1251
  %s1253 = vpop.sfrf %1252
  %p1254 = scmp.eq.s32.totalorder %s1253, 0
  %p1255 = pneg %p1254
  %1257 = shalt.err (%p1255)
  %s1258 = scalar_lea.sflag [#allocation7], 3
  %1259 = vsyncmov %s1258
  %s1260 = vpop.sfrf %1259
  %p1261 = scmp.eq.s32.totalorder %s1260, 0
  %p1262 = pneg %p1261
  %1264 = shalt.err (%p1262)

</llo_original>
